<compile_context>
chip_gen: v7x
topology: tpu7x:2x2x1
jax: 0.10.0
libtpu: 0.0.40
codegen_flags: <defaults>
</compile_context>

<pallas_src>
import jax
import jax.numpy as jnp
from jax.experimental import pallas as pl
from jax.experimental.pallas import tpu as pltpu

_ROWS_PER_LANE_ROW = 8  # batch rows packed into one lane-dense row (one sublane group)


def weighted_ensemble_kernel(wbd_ref, x_ref, o_ref):
    # x_ref: (TR, 8*M*C)   wbd_ref: (8*M*C, 8*C)   o_ref: (TR, 8*C)
    o_ref[...] = jnp.dot(
        x_ref[...],
        wbd_ref[...],
        preferred_element_type=jnp.float32,
        precision=jax.lax.Precision.HIGHEST,
    ).astype(o_ref.dtype)


def _roundup(x, m):
    return -(-x // m) * m


def _choose_block_rows(num_rows, in_width, out_width, itemsize,
                       target_in_bytes=8 << 20, vmem_budget_bytes=32 << 20):
    """Pick a lane-row tile from the padded, double-buffered VMEM footprint."""
    in_pad = _roundup(in_width, 128)                       # lanes after 128-rounding
    out_pad = _roundup(out_width, 128)
    per_row_vmem = 2 * (in_pad + out_pad) * itemsize       # double-buffered in + out
    cap_rows = max(8, (vmem_budget_bytes // per_row_vmem) // 8 * 8)
    # Tile sized to stream ~target_in_bytes of *real* input data per grid step.
    tr = max(8, (target_in_bytes // max(1, in_width * itemsize)) // 8 * 8)
    tr = min(tr, cap_rows)
    if num_rows >= 16:
        # Keep at least 2 grid steps when possible (v7x: two TensorCores, "parallel" axis).
        tr = min(tr, _roundup(pl.cdiv(num_rows, 2), 8))
    return max(1, min(tr, num_rows))


def _build_block_diag_weights(weights, num_model, num_classes, dtype):
    """ReLU + column-normalize, then scatter into a block-diagonal (8*M*C, 8*C) matrix."""
    w = jnp.maximum(weights.astype(jnp.float32), 0.0)
    wn = w / jnp.sum(w, axis=0, keepdims=True)             # (M, C); exact divide for parity
    eye_c = jnp.eye(num_classes, dtype=jnp.float32)
    # inner[m*C + c', c] = wn[m, c] * (c' == c)   -> shape (M*C, C)
    inner = (wn[:, None, :] * eye_c[None, :, :]).reshape(num_model * num_classes,
                                                         num_classes)
    # Block-diagonal over the 8 packed batch rows -> (8*M*C, 8*C)
    w_bd = jnp.kron(jnp.eye(_ROWS_PER_LANE_ROW, dtype=jnp.float32), inner)
    return w_bd.astype(dtype)


def weighted_model_forward(data, weights, num_model, num_classes, block_rows=None):
    """data: (B, num_model*num_classes), weights: (num_model, num_classes) -> (B, num_classes)."""
    B, MC = data.shape
    assert MC == num_model * num_classes, "data last dim must be num_model*num_classes"
    R = _ROWS_PER_LANE_ROW
    itemsize = jnp.dtype(data.dtype).itemsize

    # Pad the batch to a multiple of 8 (padded rows are sliced off afterwards).
    b_pad = _roundup(B, R)
    if b_pad != B:
        data = jnp.pad(data, ((0, b_pad - B), (0, 0)))

    # Lane-dense metadata reshapes (row-major contiguous, no data movement).
    in_width = R * MC                                      # e.g. 8*64  = 512 lanes
    out_width = R * num_classes                            # e.g. 8*16  = 128 lanes
    num_rows = b_pad // R
    data_ld = data.reshape(num_rows, in_width)

    w_bd = _build_block_diag_weights(weights, num_model, num_classes, data.dtype)

    if block_rows is None:
        block_rows = _choose_block_rows(num_rows, in_width, out_width, itemsize)
    tr = block_rows
    grid = (pl.cdiv(num_rows, tr),)

    # Padded, double-buffered VMEM footprint (data + output + W_bd) + headroom.
    in_pad = _roundup(in_width, 128)
    out_pad = _roundup(out_width, 128)
    vmem_bytes = (2 * tr * (in_pad + out_pad) * itemsize
                  + 2 * in_pad * out_pad * itemsize
                  + (4 << 20))
    vmem_limit = int(min(max(vmem_bytes, 32 << 20), 48 << 20))

    cost = pl.CostEstimate(
        flops=2 * num_rows * in_width * out_width,
        transcendentals=0,
        bytes_accessed=(num_rows * (in_width + out_width) * itemsize
                        + in_width * out_width * itemsize),
    )

    out_ld = pl.pallas_call(
        weighted_ensemble_kernel,
        out_shape=jax.ShapeDtypeStruct((num_rows, out_width), data.dtype),
        grid=grid,
        in_specs=[
            # Small block-diagonal weight matrix, same block every step.
            pl.BlockSpec((in_width, out_width), lambda i: (0, 0)),
            # Streamed lane-dense batch tiles.
            pl.BlockSpec((tr, in_width), lambda i: (i, 0)),
        ],
        out_specs=pl.BlockSpec((tr, out_width), lambda i: (i, 0)),
        compiler_params=pltpu.CompilerParams(
            dimension_semantics=("parallel",),     # independent batch tiles (v7x: 2 TCs)
            vmem_limit_bytes=vmem_limit,
        ),
        cost_estimate=cost,
    )(w_bd, data_ld)

    out = out_ld.reshape(b_pad, num_classes)
    return out[:B] if b_pad != B else out


def _reference(data, weights, num_model, num_classes):
    w = jnp.maximum(weights, 0.0)
    wn = w / jnp.sum(w, axis=0, keepdims=True)
    x3 = data.reshape(data.shape[0], num_model, num_classes)
    return jnp.sum(x3 * wn[None, :, :], axis=1)


if __name__ == "__main__":
    num_model = 4
    num_classes = 16

    # Matches nn.Parameter(torch.ones(M, C)).
    weights = jnp.ones((num_model, num_classes), dtype=jnp.float32)

    # Single-tile example (64 rows -> 8 lane-dense rows, grid = 1).
    batch = 64
    key = jax.random.PRNGKey(0)
    data = jax.random.normal(key, (batch, num_model * num_classes), dtype=jnp.float32)
    out = jax.block_until_ready(
        weighted_model_forward(data, weights, num_model, num_classes))
    ref = _reference(data, weights, num_model, num_classes)
    assert out.shape == (batch, num_classes)
    assert jnp.allclose(out, ref, atol=1e-4, rtol=1e-4)

    # Multi-tile + non-multiple-of-8 batch: 250 rows -> 256 padded -> 32 lane rows,
    # block_rows=8 -> 4 grid steps; random positive weights exercise the normalization.
    k1, k2 = jax.random.split(jax.random.PRNGKey(1))
    batch2 = 250
    weights2 = jax.random.uniform(k1, (num_model, num_classes), dtype=jnp.float32) + 0.1
    data2 = jax.random.normal(k2, (batch2, num_model * num_classes), dtype=jnp.float32)
    out2 = jax.block_until_ready(
        weighted_model_forward(data2, weights2, num_model, num_classes, block_rows=8))
    ref2 = _reference(data2, weights2, num_model, num_classes)
    assert out2.shape == (batch2, num_classes)
    assert jnp.allclose(out2, ref2, atol=1e-4, rtol=1e-4)

    print("KERNEL_OK")
</pallas_src>

<mosaic_0001>
module attributes {stable_mosaic.version = 11 : i64} {
  func.func @weighted_ensemble_kernel(%arg0: i32, %arg1: memref<512x128xf32, #tpu.memory_space<vmem>>, %arg2: memref<8x512xf32, #tpu.memory_space<vmem>>, %arg3: memref<8x128xf32, #tpu.memory_space<vmem>>) attributes {dimension_semantics = [#tpu.dimension_semantics<parallel>], iteration_bounds = array<i64: 1>, scalar_prefetch = 0 : i64, scratch_operands = 0 : i64, tpu.core_type = #tpu.core_type<tc>, window_params = [{pipeline_mode = #tpu.pipeline_mode<synchronous>, transform_indices = @transform_0, window_bounds = array<i64: 512, 128>}, {transform_indices = @transform_1, window_bounds = array<i64: 8, 512>}, {transform_indices = @transform_2, window_bounds = array<i64: 8, 128>}]} {
    %c0 = arith.constant 0 : index
    %c0_0 = arith.constant 0 : index
    %0 = vector.load %arg2[%c0, %c0_0] : memref<8x512xf32, #tpu.memory_space<vmem>>, vector<8x512xf32>
    %c0_1 = arith.constant 0 : index
    %c0_2 = arith.constant 0 : index
    %1 = vector.load %arg1[%c0_1, %c0_2] : memref<512x128xf32, #tpu.memory_space<vmem>>, vector<512x128xf32>
    %cst = arith.constant dense<0.000000e+00> : vector<8x128xf32>
    %2 = tpu.matmul %0, %1, %cst {dimension_numbers = #tpu.dot_dimension_numbers<[1], [0], [0], [1], [0, 0, 1, 1], [], []>, precision = #tpu.contract_precision<fp32>} : vector<8x512xf32>, vector<512x128xf32>, vector<8x128xf32> -> vector<8x128xf32>
    %c0_3 = arith.constant 0 : index
    %c0_4 = arith.constant 0 : index
    %3 = vector.load %arg3[%c0_3, %c0_4] : memref<8x128xf32, #tpu.memory_space<vmem>>, vector<8x128xf32>
    tpu.vector_store %arg3[%c0_3, %c0_4], %2 {strides = array<i32>} : memref<8x128xf32, #tpu.memory_space<vmem>>, vector<8x128xf32>,
    return
  }
  func.func @transform_0(%arg0: i32) -> (i32, i32) {
    %c0_i32 = arith.constant 0 : i32
    %c0_i32_0 = arith.constant 0 : i32
    %c0_i32_1 = arith.constant 0 : i32
    return %c0_i32, %c0_i32_0 : i32, i32
  }
  func.func @transform_1(%arg0: i32) -> (i32, i32) {
    %c0_i32 = arith.constant 0 : i32
    %c0_i32_0 = arith.constant 0 : i32
    return %arg0, %c0_i32 : i32, i32
  }
  func.func @transform_2(%arg0: i32) -> (i32, i32) {
    %c0_i32 = arith.constant 0 : i32
    %c0_i32_0 = arith.constant 0 : i32
    return %arg0, %c0_i32 : i32, i32
  }
}

</mosaic_0001>

<llo_original>
// kernel: tpu_custom_call.1
$region0: #{tpu_custom_call.1}
  #allocation0 [shape = 'u32[]', space=smem, size = 0x4, offset = 0x4, fixed_abs, tag = 'smem constant byte address 0x4 - core index']
  #allocation1 [shape = 'u32[144,128]{1,0:T(1,128)}', space=vmem, size = 0x12000, scoped, tag = 'internal scratch']
  %s0 = inlined_call_operand.hbm [shape: f32[512,128], index: 0, kind: input, shape index: {}]
  %s1 = inlined_call_operand.hbm [shape: f32[8,512], index: 1, kind: input, shape index: {}]
  %s2 = inlined_call_operand.hbm [shape: f32[8,128], index: 2, kind: output, shape index: {}]
  %s3 = sld [smem:[#allocation0]]
  $region26: #{tpu_custom_call.1} parent=0
    _
  %s5 = ssub.s32 1, %s3
  %s6 = scalar_select 0, %s5, %s3
  $region1: #{tpu_custom_call.1} parent=0
    #allocation2 [shape = 'u8[262144]{0}', space=vmem, size = 0x40000, scoped, tag = 'input window, operand 0, single buffered']
    #allocation3 [shape = 's32[1]{0}', space=sflag, size = 0x4, scoped, tag = 'scoped memory for tpu_custom_call.1']
    #allocation4 [shape = 's32[1]{0}', space=sflag, size = 0x4, scoped, tag = 'scoped memory for tpu_custom_call.1']
    #allocation5 [shape = 'u8[16384]{0}', space=vmem, size = 0x4000, scoped, tag = 'input window, operand 1, single buffered']
    #allocation6 [shape = 's32[1]{0}', space=sflag, size = 0x4, scoped, tag = 'scoped memory for tpu_custom_call.1']
    #allocation7 [shape = 'u8[4096]{0}', space=vmem, size = 0x1000, scoped, tag = 'output window, operand 0, single buffered']
    %7 = vsyncpa [#allocation3], 0
    %8 = vsyncpa [#allocation6], 0
    %9 = vsyncpa [#allocation4], 0
    // Predicated region
    $region2: #{tpu_custom_call.1} parent=1 // pred_check
      _
    $region3: #{tpu_custom_call.1} parent=1 // pred_check_branch
      %11 = sbr.rel (0) target = $region5
    $region4: #{tpu_custom_call.1} parent=1 // pred_region
      %s13 = ssub.s32 8192, 8192
      %14 = vsyncadd [#allocation3], %s13
      %s15 = sshll.u32 [#allocation2], 4
      %s16 = int_to_ptr.vmem [resolvable:$true] %s15
      %21 = dma.hbm_to_vmem [thread:$0]  %s0, 8192, %s16, [#allocation3], 128, 128, 8
    $region5: #{tpu_custom_call.1} parent=1 // pred_fallthru
      _
    // Predicated region
    $region6: #{tpu_custom_call.1} parent=1 // pred_check
      _
    $region7: #{tpu_custom_call.1} parent=1 // pred_check_branch
      %23 = sbr.rel (0) target = $region9
    $region8: #{tpu_custom_call.1} parent=1 // pred_region
      %s25 = ssub.s32 512, 512
      %26 = vsyncadd [#allocation6], %s25
      %s28 = sshll.u32 [#allocation5], 4
      %s29 = int_to_ptr.vmem [resolvable:$true] %s28
      %31 = dma.hbm_to_vmem [thread:$0]  %s1, 512, %s29, [#allocation6]
    $region9: #{tpu_custom_call.1} parent=1 // pred_fallthru
      _
    // Predicated region
    $region10: #{tpu_custom_call.1} parent=1 // pred_check
      _
    $region11: #{tpu_custom_call.1} parent=1 // pred_check_branch
      %33 = sbr.rel (0) target = $region13
    $region12: #{tpu_custom_call.1} parent=1 // pred_region
      %34 = dma.done [#allocation3], 8192
    $region13: #{tpu_custom_call.1} parent=1 // pred_fallthru
      _
    // Predicated region
    $region14: #{tpu_custom_call.1} parent=1 // pred_check
      _
    $region15: #{tpu_custom_call.1} parent=1 // pred_check_branch
      %36 = sbr.rel (0) target = $region17
    $region16: #{tpu_custom_call.1} parent=1 // pred_region
      %37 = dma.done [#allocation6], 512
    $region17: #{tpu_custom_call.1} parent=1 // pred_fallthru
      _
    %v38 = vld [vmem:[#allocation5] sm:$0xff]
    %v39 = vld [vmem:[#allocation5 + $0x8] sm:$0xff]
    %v40 = vld [vmem:[#allocation5 + $0x10] sm:$0xff]
    %v41 = vld [vmem:[#allocation5 + $0x18] sm:$0xff]
    %v42 = vld [vmem:[#allocation2] sm:$0xff]
    %v43 = vld [vmem:[#allocation2 + $0x8] sm:$0xff]
    %v44 = vld [vmem:[#allocation2 + $0x10] sm:$0xff]
    %v45 = vld [vmem:[#allocation2 + $0x18] sm:$0xff]
    %v46 = vld [vmem:[#allocation2 + $0x20] sm:$0xff]
    %v47 = vld [vmem:[#allocation2 + $0x28] sm:$0xff]
    %v48 = vld [vmem:[#allocation2 + $0x30] sm:$0xff]
    %v49 = vld [vmem:[#allocation2 + $0x38] sm:$0xff]
    %v50 = vld [vmem:[#allocation2 + $0x40] sm:$0xff]
    %v51 = vld [vmem:[#allocation2 + $0x48] sm:$0xff]
    %v52 = vld [vmem:[#allocation2 + $0x50] sm:$0xff]
    %v53 = vld [vmem:[#allocation2 + $0x58] sm:$0xff]
    %v54 = vld [vmem:[#allocation2 + $0x60] sm:$0xff]
    %v55 = vld [vmem:[#allocation2 + $0x68] sm:$0xff]
    %v56 = vld [vmem:[#allocation2 + $0x70] sm:$0xff]
    %v57 = vld [vmem:[#allocation2 + $0x78] sm:$0xff]
    %v58 = vld [vmem:[#allocation2 + $0x80] sm:$0xff]
    %v59 = vld [vmem:[#allocation2 + $0x88] sm:$0xff]
    %v60 = vld [vmem:[#allocation2 + $0x90] sm:$0xff]
    %v61 = vld [vmem:[#allocation2 + $0x98] sm:$0xff]
    %v62 = vld [vmem:[#allocation2 + $0xa0] sm:$0xff]
    %v63 = vld [vmem:[#allocation2 + $0xa8] sm:$0xff]
    %v64 = vld [vmem:[#allocation2 + $0xb0] sm:$0xff]
    %v65 = vld [vmem:[#allocation2 + $0xb8] sm:$0xff]
    %v66 = vld [vmem:[#allocation2 + $0xc0] sm:$0xff]
    %v67 = vld [vmem:[#allocation2 + $0xc8] sm:$0xff]
    %v68 = vld [vmem:[#allocation2 + $0xd0] sm:$0xff]
    %v69 = vld [vmem:[#allocation2 + $0xd8] sm:$0xff]
    %v70 = vld [vmem:[#allocation2 + $0xe0] sm:$0xff]
    %v71 = vld [vmem:[#allocation2 + $0xe8] sm:$0xff]
    %v72 = vld [vmem:[#allocation2 + $0xf0] sm:$0xff]
    %v73 = vld [vmem:[#allocation2 + $0xf8] sm:$0xff]
    %v74 = vld [vmem:[#allocation2 + $0x100] sm:$0xff]
    %v75 = vld [vmem:[#allocation2 + $0x108] sm:$0xff]
    %v76 = vld [vmem:[#allocation2 + $0x110] sm:$0xff]
    %v77 = vld [vmem:[#allocation2 + $0x118] sm:$0xff]
    %v78 = vld [vmem:[#allocation2 + $0x120] sm:$0xff]
    %v79 = vld [vmem:[#allocation2 + $0x128] sm:$0xff]
    %v80 = vld [vmem:[#allocation2 + $0x130] sm:$0xff]
    %v81 = vld [vmem:[#allocation2 + $0x138] sm:$0xff]
    %v82 = vld [vmem:[#allocation2 + $0x140] sm:$0xff]
    %v83 = vld [vmem:[#allocation2 + $0x148] sm:$0xff]
    %v84 = vld [vmem:[#allocation2 + $0x150] sm:$0xff]
    %v85 = vld [vmem:[#allocation2 + $0x158] sm:$0xff]
    %v86 = vld [vmem:[#allocation2 + $0x160] sm:$0xff]
    %v87 = vld [vmem:[#allocation2 + $0x168] sm:$0xff]
    %v88 = vld [vmem:[#allocation2 + $0x170] sm:$0xff]
    %v89 = vld [vmem:[#allocation2 + $0x178] sm:$0xff]
    %v90 = vld [vmem:[#allocation2 + $0x180] sm:$0xff]
    %v91 = vld [vmem:[#allocation2 + $0x188] sm:$0xff]
    %v92 = vld [vmem:[#allocation2 + $0x190] sm:$0xff]
    %v93 = vld [vmem:[#allocation2 + $0x198] sm:$0xff]
    %v94 = vld [vmem:[#allocation2 + $0x1a0] sm:$0xff]
    %v95 = vld [vmem:[#allocation2 + $0x1a8] sm:$0xff]
    %v96 = vld [vmem:[#allocation2 + $0x1b0] sm:$0xff]
    %v97 = vld [vmem:[#allocation2 + $0x1b8] sm:$0xff]
    %v98 = vld [vmem:[#allocation2 + $0x1c0] sm:$0xff]
    %v99 = vld [vmem:[#allocation2 + $0x1c8] sm:$0xff]
    %v100 = vld [vmem:[#allocation2 + $0x1d0] sm:$0xff]
    %v101 = vld [vmem:[#allocation2 + $0x1d8] sm:$0xff]
    %v102 = vld [vmem:[#allocation2 + $0x1e0] sm:$0xff]
    %v103 = vld [vmem:[#allocation2 + $0x1e8] sm:$0xff]
    %v104 = vld [vmem:[#allocation2 + $0x1f0] sm:$0xff]
    %v105 = vld [vmem:[#allocation2 + $0x1f8] sm:$0xff]
    %106 = vmatprep.subr.mxu0 0.0
    %v107 = vand.u32 %v42, 4294901760
    %108 = vmatpush1.msra.mxu0 %v107
    %109 = vmatprep.subr.mxu0 0.0
    %v110 = vand.u32 %v43, 4294901760
    %111 = vmatpush1.msra.mxu0 %v110
    %112 = vmatprep.subr.mxu0 0.0
    %v113 = vand.u32 %v44, 4294901760
    %114 = vmatpush1.msra.mxu0 %v113
    %115 = vmatprep.subr.mxu0 0.0
    %v116 = vand.u32 %v45, 4294901760
    %117 = vmatpush1.msra.mxu0 %v116
    %118 = vmatprep.subr.mxu0 0.0
    %v119 = vand.u32 %v46, 4294901760
    %120 = vmatpush1.msra.mxu0 %v119
    %121 = vmatprep.subr.mxu0 0.0
    %v122 = vand.u32 %v47, 4294901760
    %123 = vmatpush1.msra.mxu0 %v122
    %124 = vmatprep.subr.mxu0 0.0
    %v125 = vand.u32 %v48, 4294901760
    %126 = vmatpush1.msra.mxu0 %v125
    %127 = vmatprep.subr.mxu0 0.0
    %v128 = vand.u32 %v49, 4294901760
    %129 = vmatpush1.msra.mxu0 %v128
    %130 = vmatprep.subr.mxu0 0.0
    %v131 = vand.u32 %v50, 4294901760
    %132 = vmatpush1.msra.mxu0 %v131
    %133 = vmatprep.subr.mxu0 0.0
    %v134 = vand.u32 %v51, 4294901760
    %135 = vmatpush1.msra.mxu0 %v134
    %136 = vmatprep.subr.mxu0 0.0
    %v137 = vand.u32 %v52, 4294901760
    %138 = vmatpush1.msra.mxu0 %v137
    %139 = vmatprep.subr.mxu0 0.0
    %v140 = vand.u32 %v53, 4294901760
    %141 = vmatpush1.msra.mxu0 %v140
    %142 = vmatprep.subr.mxu0 0.0
    %v143 = vand.u32 %v54, 4294901760
    %144 = vmatpush1.msra.mxu0 %v143
    %145 = vmatprep.subr.mxu0 0.0
    %v146 = vand.u32 %v55, 4294901760
    %147 = vmatpush1.msra.mxu0 %v146
    %148 = vmatprep.subr.mxu0 0.0
    %v149 = vand.u32 %v56, 4294901760
    %150 = vmatpush1.msra.mxu0 %v149
    %151 = vmatprep.subr.mxu0 0.0
    %v152 = vand.u32 %v57, 4294901760
    %153 = vmatpush1.msra.mxu0 %v152
    %154 = vmatprep.subr.mxu0 0.0
    %v155 = vand.u32 %v58, 4294901760
    %156 = vmatpush1.msra.mxu0 %v155
    %157 = vmatprep.subr.mxu0 0.0
    %v158 = vand.u32 %v59, 4294901760
    %159 = vmatpush1.msra.mxu0 %v158
    %160 = vmatprep.subr.mxu0 0.0
    %v161 = vand.u32 %v60, 4294901760
    %162 = vmatpush1.msra.mxu0 %v161
    %163 = vmatprep.subr.mxu0 0.0
    %v164 = vand.u32 %v61, 4294901760
    %165 = vmatpush1.msra.mxu0 %v164
    %166 = vmatprep.subr.mxu0 0.0
    %v167 = vand.u32 %v62, 4294901760
    %168 = vmatpush1.msra.mxu0 %v167
    %169 = vmatprep.subr.mxu0 0.0
    %v170 = vand.u32 %v63, 4294901760
    %171 = vmatpush1.msra.mxu0 %v170
    %172 = vmatprep.subr.mxu0 0.0
    %v173 = vand.u32 %v64, 4294901760
    %174 = vmatpush1.msra.mxu0 %v173
    %175 = vmatprep.subr.mxu0 0.0
    %v176 = vand.u32 %v65, 4294901760
    %177 = vmatpush1.msra.mxu0 %v176
    %178 = vmatprep.subr.mxu0 0.0
    %v179 = vand.u32 %v66, 4294901760
    %180 = vmatpush1.msra.mxu0 %v179
    %181 = vmatprep.subr.mxu0 0.0
    %v182 = vand.u32 %v67, 4294901760
    %183 = vmatpush1.msra.mxu0 %v182
    %184 = vmatprep.subr.mxu0 0.0
    %v185 = vand.u32 %v68, 4294901760
    %186 = vmatpush1.msra.mxu0 %v185
    %187 = vmatprep.subr.mxu0 0.0
    %v188 = vand.u32 %v69, 4294901760
    %189 = vmatpush1.msra.mxu0 %v188
    %190 = vmatprep.subr.mxu0 0.0
    %v191 = vand.u32 %v70, 4294901760
    %192 = vmatpush1.msra.mxu0 %v191
    %193 = vmatprep.subr.mxu0 0.0
    %v194 = vand.u32 %v71, 4294901760
    %195 = vmatpush1.msra.mxu0 %v194
    %196 = vmatprep.subr.mxu0 0.0
    %v197 = vand.u32 %v72, 4294901760
    %198 = vmatpush1.msra.mxu0 %v197
    %199 = vmatprep.subr.mxu0 0.0
    %v200 = vand.u32 %v73, 4294901760
    %201 = vmatpush1.msra.mxu0 %v200
    %v202 = vand.u32 %v39, 4294901760
    %v203 = vsub.f32 %v39, %v202
    %v204 = vand.u32 %v203, 4294901760
    %v205 = vsub.f32 %v203, %v204
    %v206 = vand.u32 %v205, 4294901760
    %207 = vmatprep.mubr.f32.mxu0 %v206
    %v208 = vand.u32 %v38, 4294901760
    %v209 = vsub.f32 %v38, %v208
    %v210 = vand.u32 %v209, 4294901760
    %v211 = vsub.f32 %v209, %v210
    %v212 = vand.u32 %v211, 4294901760
    %213 = vmatmul.mubr.f32.gmra.mrb[0].mxu0 %v212
    %v214 = vpop.f32.mrb[0].mxu0
    %v215 = vadd.f32 0.0, %v214
    %v216 = vpop.f32.mrb[0].mxu0
    %217 = vdwg.mxu0
    %218 = vmatprep.subr.mxu0 0.0
    %v219 = vand.u32 %v42, 4294901760
    %v220 = vsub.f32 %v42, %v219
    %v221 = vand.u32 %v220, 4294901760
    %v222 = vsub.f32 %v220, %v221
    %v223 = vand.u32 %v222, 4294901760
    %224 = vmatpush1.msra.mxu0 %v223
    %225 = vmatprep.subr.mxu0 0.0
    %v226 = vand.u32 %v43, 4294901760
    %v227 = vsub.f32 %v43, %v226
    %v228 = vand.u32 %v227, 4294901760
    %v229 = vsub.f32 %v227, %v228
    %v230 = vand.u32 %v229, 4294901760
    %231 = vmatpush1.msra.mxu0 %v230
    %232 = vmatprep.subr.mxu0 0.0
    %v233 = vand.u32 %v44, 4294901760
    %v234 = vsub.f32 %v44, %v233
    %v235 = vand.u32 %v234, 4294901760
    %v236 = vsub.f32 %v234, %v235
    %v237 = vand.u32 %v236, 4294901760
    %238 = vmatpush1.msra.mxu0 %v237
    %239 = vmatprep.subr.mxu0 0.0
    %v240 = vand.u32 %v45, 4294901760
    %v241 = vsub.f32 %v45, %v240
    %v242 = vand.u32 %v241, 4294901760
    %v243 = vsub.f32 %v241, %v242
    %v244 = vand.u32 %v243, 4294901760
    %245 = vmatpush1.msra.mxu0 %v244
    %246 = vmatprep.subr.mxu0 0.0
    %v247 = vand.u32 %v46, 4294901760
    %v248 = vsub.f32 %v46, %v247
    %v249 = vand.u32 %v248, 4294901760
    %v250 = vsub.f32 %v248, %v249
    %v251 = vand.u32 %v250, 4294901760
    %252 = vmatpush1.msra.mxu0 %v251
    %253 = vmatprep.subr.mxu0 0.0
    %v254 = vand.u32 %v47, 4294901760
    %v255 = vsub.f32 %v47, %v254
    %v256 = vand.u32 %v255, 4294901760
    %v257 = vsub.f32 %v255, %v256
    %v258 = vand.u32 %v257, 4294901760
    %259 = vmatpush1.msra.mxu0 %v258
    %260 = vmatprep.subr.mxu0 0.0
    %v261 = vand.u32 %v48, 4294901760
    %v262 = vsub.f32 %v48, %v261
    %v263 = vand.u32 %v262, 4294901760
    %v264 = vsub.f32 %v262, %v263
    %v265 = vand.u32 %v264, 4294901760
    %266 = vmatpush1.msra.mxu0 %v265
    %267 = vmatprep.subr.mxu0 0.0
    %v268 = vand.u32 %v49, 4294901760
    %v269 = vsub.f32 %v49, %v268
    %v270 = vand.u32 %v269, 4294901760
    %v271 = vsub.f32 %v269, %v270
    %v272 = vand.u32 %v271, 4294901760
    %273 = vmatpush1.msra.mxu0 %v272
    %274 = vmatprep.subr.mxu0 0.0
    %v275 = vand.u32 %v50, 4294901760
    %v276 = vsub.f32 %v50, %v275
    %v277 = vand.u32 %v276, 4294901760
    %v278 = vsub.f32 %v276, %v277
    %v279 = vand.u32 %v278, 4294901760
    %280 = vmatpush1.msra.mxu0 %v279
    %281 = vmatprep.subr.mxu0 0.0
    %v282 = vand.u32 %v51, 4294901760
    %v283 = vsub.f32 %v51, %v282
    %v284 = vand.u32 %v283, 4294901760
    %v285 = vsub.f32 %v283, %v284
    %v286 = vand.u32 %v285, 4294901760
    %287 = vmatpush1.msra.mxu0 %v286
    %288 = vmatprep.subr.mxu0 0.0
    %v289 = vand.u32 %v52, 4294901760
    %v290 = vsub.f32 %v52, %v289
    %v291 = vand.u32 %v290, 4294901760
    %v292 = vsub.f32 %v290, %v291
    %v293 = vand.u32 %v292, 4294901760
    %294 = vmatpush1.msra.mxu0 %v293
    %295 = vmatprep.subr.mxu0 0.0
    %v296 = vand.u32 %v53, 4294901760
    %v297 = vsub.f32 %v53, %v296
    %v298 = vand.u32 %v297, 4294901760
    %v299 = vsub.f32 %v297, %v298
    %v300 = vand.u32 %v299, 4294901760
    %301 = vmatpush1.msra.mxu0 %v300
    %302 = vmatprep.subr.mxu0 0.0
    %v303 = vand.u32 %v54, 4294901760
    %v304 = vsub.f32 %v54, %v303
    %v305 = vand.u32 %v304, 4294901760
    %v306 = vsub.f32 %v304, %v305
    %v307 = vand.u32 %v306, 4294901760
    %308 = vmatpush1.msra.mxu0 %v307
    %309 = vmatprep.subr.mxu0 0.0
    %v310 = vand.u32 %v55, 4294901760
    %v311 = vsub.f32 %v55, %v310
    %v312 = vand.u32 %v311, 4294901760
    %v313 = vsub.f32 %v311, %v312
    %v314 = vand.u32 %v313, 4294901760
    %315 = vmatpush1.msra.mxu0 %v314
    %316 = vmatprep.subr.mxu0 0.0
    %v317 = vand.u32 %v56, 4294901760
    %v318 = vsub.f32 %v56, %v317
    %v319 = vand.u32 %v318, 4294901760
    %v320 = vsub.f32 %v318, %v319
    %v321 = vand.u32 %v320, 4294901760
    %322 = vmatpush1.msra.mxu0 %v321
    %323 = vmatprep.subr.mxu0 0.0
    %v324 = vand.u32 %v57, 4294901760
    %v325 = vsub.f32 %v57, %v324
    %v326 = vand.u32 %v325, 4294901760
    %v327 = vsub.f32 %v325, %v326
    %v328 = vand.u32 %v327, 4294901760
    %329 = vmatpush1.msra.mxu0 %v328
    %330 = vmatprep.subr.mxu0 0.0
    %v331 = vand.u32 %v58, 4294901760
    %v332 = vsub.f32 %v58, %v331
    %v333 = vand.u32 %v332, 4294901760
    %v334 = vsub.f32 %v332, %v333
    %v335 = vand.u32 %v334, 4294901760
    %336 = vmatpush1.msra.mxu0 %v335
    %337 = vmatprep.subr.mxu0 0.0
    %v338 = vand.u32 %v59, 4294901760
    %v339 = vsub.f32 %v59, %v338
    %v340 = vand.u32 %v339, 4294901760
    %v341 = vsub.f32 %v339, %v340
    %v342 = vand.u32 %v341, 4294901760
    %343 = vmatpush1.msra.mxu0 %v342
    %344 = vmatprep.subr.mxu0 0.0
    %v345 = vand.u32 %v60, 4294901760
    %v346 = vsub.f32 %v60, %v345
    %v347 = vand.u32 %v346, 4294901760
    %v348 = vsub.f32 %v346, %v347
    %v349 = vand.u32 %v348, 4294901760
    %350 = vmatpush1.msra.mxu0 %v349
    %351 = vmatprep.subr.mxu0 0.0
    %v352 = vand.u32 %v61, 4294901760
    %v353 = vsub.f32 %v61, %v352
    %v354 = vand.u32 %v353, 4294901760
    %v355 = vsub.f32 %v353, %v354
    %v356 = vand.u32 %v355, 4294901760
    %357 = vmatpush1.msra.mxu0 %v356
    %358 = vmatprep.subr.mxu0 0.0
    %v359 = vand.u32 %v62, 4294901760
    %v360 = vsub.f32 %v62, %v359
    %v361 = vand.u32 %v360, 4294901760
    %v362 = vsub.f32 %v360, %v361
    %v363 = vand.u32 %v362, 4294901760
    %364 = vmatpush1.msra.mxu0 %v363
    %365 = vmatprep.subr.mxu0 0.0
    %v366 = vand.u32 %v63, 4294901760
    %v367 = vsub.f32 %v63, %v366
    %v368 = vand.u32 %v367, 4294901760
    %v369 = vsub.f32 %v367, %v368
    %v370 = vand.u32 %v369, 4294901760
    %371 = vmatpush1.msra.mxu0 %v370
    %372 = vmatprep.subr.mxu0 0.0
    %v373 = vand.u32 %v64, 4294901760
    %v374 = vsub.f32 %v64, %v373
    %v375 = vand.u32 %v374, 4294901760
    %v376 = vsub.f32 %v374, %v375
    %v377 = vand.u32 %v376, 4294901760
    %378 = vmatpush1.msra.mxu0 %v377
    %379 = vmatprep.subr.mxu0 0.0
    %v380 = vand.u32 %v65, 4294901760
    %v381 = vsub.f32 %v65, %v380
    %v382 = vand.u32 %v381, 4294901760
    %v383 = vsub.f32 %v381, %v382
    %v384 = vand.u32 %v383, 4294901760
    %385 = vmatpush1.msra.mxu0 %v384
    %386 = vmatprep.subr.mxu0 0.0
    %v387 = vand.u32 %v66, 4294901760
    %v388 = vsub.f32 %v66, %v387
    %v389 = vand.u32 %v388, 4294901760
    %v390 = vsub.f32 %v388, %v389
    %v391 = vand.u32 %v390, 4294901760
    %392 = vmatpush1.msra.mxu0 %v391
    %393 = vmatprep.subr.mxu0 0.0
    %v394 = vand.u32 %v67, 4294901760
    %v395 = vsub.f32 %v67, %v394
    %v396 = vand.u32 %v395, 4294901760
    %v397 = vsub.f32 %v395, %v396
    %v398 = vand.u32 %v397, 4294901760
    %399 = vmatpush1.msra.mxu0 %v398
    %400 = vmatprep.subr.mxu0 0.0
    %v401 = vand.u32 %v68, 4294901760
    %v402 = vsub.f32 %v68, %v401
    %v403 = vand.u32 %v402, 4294901760
    %v404 = vsub.f32 %v402, %v403
    %v405 = vand.u32 %v404, 4294901760
    %406 = vmatpush1.msra.mxu0 %v405
    %407 = vmatprep.subr.mxu0 0.0
    %v408 = vand.u32 %v69, 4294901760
    %v409 = vsub.f32 %v69, %v408
    %v410 = vand.u32 %v409, 4294901760
    %v411 = vsub.f32 %v409, %v410
    %v412 = vand.u32 %v411, 4294901760
    %413 = vmatpush1.msra.mxu0 %v412
    %414 = vmatprep.subr.mxu0 0.0
    %v415 = vand.u32 %v70, 4294901760
    %v416 = vsub.f32 %v70, %v415
    %v417 = vand.u32 %v416, 4294901760
    %v418 = vsub.f32 %v416, %v417
    %v419 = vand.u32 %v418, 4294901760
    %420 = vmatpush1.msra.mxu0 %v419
    %421 = vmatprep.subr.mxu0 0.0
    %v422 = vand.u32 %v71, 4294901760
    %v423 = vsub.f32 %v71, %v422
    %v424 = vand.u32 %v423, 4294901760
    %v425 = vsub.f32 %v423, %v424
    %v426 = vand.u32 %v425, 4294901760
    %427 = vmatpush1.msra.mxu0 %v426
    %428 = vmatprep.subr.mxu0 0.0
    %v429 = vand.u32 %v72, 4294901760
    %v430 = vsub.f32 %v72, %v429
    %v431 = vand.u32 %v430, 4294901760
    %v432 = vsub.f32 %v430, %v431
    %v433 = vand.u32 %v432, 4294901760
    %434 = vmatpush1.msra.mxu0 %v433
    %435 = vmatprep.subr.mxu0 0.0
    %v436 = vand.u32 %v73, 4294901760
    %v437 = vsub.f32 %v73, %v436
    %v438 = vand.u32 %v437, 4294901760
    %v439 = vsub.f32 %v437, %v438
    %v440 = vand.u32 %v439, 4294901760
    %441 = vmatpush1.msra.mxu0 %v440
    %v442 = vand.u32 %v39, 4294901760
    %443 = vmatprep.mubr.f32.mxu0 %v442
    %v444 = vand.u32 %v38, 4294901760
    %445 = vmatmul.mubr.f32.gmra.mrb[0].mxu0 %v444
    %v446 = vpop.f32.mrb[0].mxu0
    %v447 = vadd.f32 %v215, %v446
    %v448 = vpop.f32.mrb[0].mxu0
    %449 = vdwg.mxu0
    %450 = vmatprep.subr.mxu0 0.0
    %v451 = vand.u32 %v42, 4294901760
    %v452 = vsub.f32 %v42, %v451
    %453 = vmatpush1.msra.mxu0 %v452
    %454 = vmatprep.subr.mxu0 0.0
    %v455 = vand.u32 %v43, 4294901760
    %v456 = vsub.f32 %v43, %v455
    %457 = vmatpush1.msra.mxu0 %v456
    %458 = vmatprep.subr.mxu0 0.0
    %v459 = vand.u32 %v44, 4294901760
    %v460 = vsub.f32 %v44, %v459
    %461 = vmatpush1.msra.mxu0 %v460
    %462 = vmatprep.subr.mxu0 0.0
    %v463 = vand.u32 %v45, 4294901760
    %v464 = vsub.f32 %v45, %v463
    %465 = vmatpush1.msra.mxu0 %v464
    %466 = vmatprep.subr.mxu0 0.0
    %v467 = vand.u32 %v46, 4294901760
    %v468 = vsub.f32 %v46, %v467
    %469 = vmatpush1.msra.mxu0 %v468
    %470 = vmatprep.subr.mxu0 0.0
    %v471 = vand.u32 %v47, 4294901760
    %v472 = vsub.f32 %v47, %v471
    %473 = vmatpush1.msra.mxu0 %v472
    %474 = vmatprep.subr.mxu0 0.0
    %v475 = vand.u32 %v48, 4294901760
    %v476 = vsub.f32 %v48, %v475
    %477 = vmatpush1.msra.mxu0 %v476
    %478 = vmatprep.subr.mxu0 0.0
    %v479 = vand.u32 %v49, 4294901760
    %v480 = vsub.f32 %v49, %v479
    %481 = vmatpush1.msra.mxu0 %v480
    %482 = vmatprep.subr.mxu0 0.0
    %v483 = vand.u32 %v50, 4294901760
    %v484 = vsub.f32 %v50, %v483
    %485 = vmatpush1.msra.mxu0 %v484
    %486 = vmatprep.subr.mxu0 0.0
    %v487 = vand.u32 %v51, 4294901760
    %v488 = vsub.f32 %v51, %v487
    %489 = vmatpush1.msra.mxu0 %v488
    %490 = vmatprep.subr.mxu0 0.0
    %v491 = vand.u32 %v52, 4294901760
    %v492 = vsub.f32 %v52, %v491
    %493 = vmatpush1.msra.mxu0 %v492
    %494 = vmatprep.subr.mxu0 0.0
    %v495 = vand.u32 %v53, 4294901760
    %v496 = vsub.f32 %v53, %v495
    %497 = vmatpush1.msra.mxu0 %v496
    %498 = vmatprep.subr.mxu0 0.0
    %v499 = vand.u32 %v54, 4294901760
    %v500 = vsub.f32 %v54, %v499
    %501 = vmatpush1.msra.mxu0 %v500
    %502 = vmatprep.subr.mxu0 0.0
    %v503 = vand.u32 %v55, 4294901760
    %v504 = vsub.f32 %v55, %v503
    %505 = vmatpush1.msra.mxu0 %v504
    %506 = vmatprep.subr.mxu0 0.0
    %v507 = vand.u32 %v56, 4294901760
    %v508 = vsub.f32 %v56, %v507
    %509 = vmatpush1.msra.mxu0 %v508
    %510 = vmatprep.subr.mxu0 0.0
    %v511 = vand.u32 %v57, 4294901760
    %v512 = vsub.f32 %v57, %v511
    %513 = vmatpush1.msra.mxu0 %v512
    %514 = vmatprep.subr.mxu0 0.0
    %v515 = vand.u32 %v58, 4294901760
    %v516 = vsub.f32 %v58, %v515
    %517 = vmatpush1.msra.mxu0 %v516
    %518 = vmatprep.subr.mxu0 0.0
    %v519 = vand.u32 %v59, 4294901760
    %v520 = vsub.f32 %v59, %v519
    %521 = vmatpush1.msra.mxu0 %v520
    %522 = vmatprep.subr.mxu0 0.0
    %v523 = vand.u32 %v60, 4294901760
    %v524 = vsub.f32 %v60, %v523
    %525 = vmatpush1.msra.mxu0 %v524
    %526 = vmatprep.subr.mxu0 0.0
    %v527 = vand.u32 %v61, 4294901760
    %v528 = vsub.f32 %v61, %v527
    %529 = vmatpush1.msra.mxu0 %v528
    %530 = vmatprep.subr.mxu0 0.0
    %v531 = vand.u32 %v62, 4294901760
    %v532 = vsub.f32 %v62, %v531
    %533 = vmatpush1.msra.mxu0 %v532
    %534 = vmatprep.subr.mxu0 0.0
    %v535 = vand.u32 %v63, 4294901760
    %v536 = vsub.f32 %v63, %v535
    %537 = vmatpush1.msra.mxu0 %v536
    %538 = vmatprep.subr.mxu0 0.0
    %v539 = vand.u32 %v64, 4294901760
    %v540 = vsub.f32 %v64, %v539
    %541 = vmatpush1.msra.mxu0 %v540
    %542 = vmatprep.subr.mxu0 0.0
    %v543 = vand.u32 %v65, 4294901760
    %v544 = vsub.f32 %v65, %v543
    %545 = vmatpush1.msra.mxu0 %v544
    %546 = vmatprep.subr.mxu0 0.0
    %v547 = vand.u32 %v66, 4294901760
    %v548 = vsub.f32 %v66, %v547
    %549 = vmatpush1.msra.mxu0 %v548
    %550 = vmatprep.subr.mxu0 0.0
    %v551 = vand.u32 %v67, 4294901760
    %v552 = vsub.f32 %v67, %v551
    %553 = vmatpush1.msra.mxu0 %v552
    %554 = vmatprep.subr.mxu0 0.0
    %v555 = vand.u32 %v68, 4294901760
    %v556 = vsub.f32 %v68, %v555
    %557 = vmatpush1.msra.mxu0 %v556
    %558 = vmatprep.subr.mxu0 0.0
    %v559 = vand.u32 %v69, 4294901760
    %v560 = vsub.f32 %v69, %v559
    %561 = vmatpush1.msra.mxu0 %v560
    %562 = vmatprep.subr.mxu0 0.0
    %v563 = vand.u32 %v70, 4294901760
    %v564 = vsub.f32 %v70, %v563
    %565 = vmatpush1.msra.mxu0 %v564
    %566 = vmatprep.subr.mxu0 0.0
    %v567 = vand.u32 %v71, 4294901760
    %v568 = vsub.f32 %v71, %v567
    %569 = vmatpush1.msra.mxu0 %v568
    %570 = vmatprep.subr.mxu0 0.0
    %v571 = vand.u32 %v72, 4294901760
    %v572 = vsub.f32 %v72, %v571
    %573 = vmatpush1.msra.mxu0 %v572
    %574 = vmatprep.subr.mxu0 0.0
    %v575 = vand.u32 %v73, 4294901760
    %v576 = vsub.f32 %v73, %v575
    %577 = vmatpush1.msra.mxu0 %v576
    %v578 = vand.u32 %v39, 4294901760
    %v579 = vsub.f32 %v39, %v578
    %580 = vmatprep.mubr.f32.mxu0 %v579
    %v581 = vand.u32 %v38, 4294901760
    %v582 = vsub.f32 %v38, %v581
    %583 = vmatmul.mubr.f32.gmra.mrb[0].mxu0 %v582
    %v584 = vpop.f32.mrb[0].mxu0
    %v585 = vadd.f32 %v447, %v584
    %v586 = vpop.f32.mrb[0].mxu0
    %587 = vdwg.mxu0
    %588 = vmatprep.subr.mxu0 0.0
    %v589 = vand.u32 %v42, 4294901760
    %590 = vmatpush1.msra.mxu0 %v589
    %591 = vmatprep.subr.mxu0 0.0
    %v592 = vand.u32 %v43, 4294901760
    %593 = vmatpush1.msra.mxu0 %v592
    %594 = vmatprep.subr.mxu0 0.0
    %v595 = vand.u32 %v44, 4294901760
    %596 = vmatpush1.msra.mxu0 %v595
    %597 = vmatprep.subr.mxu0 0.0
    %v598 = vand.u32 %v45, 4294901760
    %599 = vmatpush1.msra.mxu0 %v598
    %600 = vmatprep.subr.mxu0 0.0
    %v601 = vand.u32 %v46, 4294901760
    %602 = vmatpush1.msra.mxu0 %v601
    %603 = vmatprep.subr.mxu0 0.0
    %v604 = vand.u32 %v47, 4294901760
    %605 = vmatpush1.msra.mxu0 %v604
    %606 = vmatprep.subr.mxu0 0.0
    %v607 = vand.u32 %v48, 4294901760
    %608 = vmatpush1.msra.mxu0 %v607
    %609 = vmatprep.subr.mxu0 0.0
    %v610 = vand.u32 %v49, 4294901760
    %611 = vmatpush1.msra.mxu0 %v610
    %612 = vmatprep.subr.mxu0 0.0
    %v613 = vand.u32 %v50, 4294901760
    %614 = vmatpush1.msra.mxu0 %v613
    %615 = vmatprep.subr.mxu0 0.0
    %v616 = vand.u32 %v51, 4294901760
    %617 = vmatpush1.msra.mxu0 %v616
    %618 = vmatprep.subr.mxu0 0.0
    %v619 = vand.u32 %v52, 4294901760
    %620 = vmatpush1.msra.mxu0 %v619
    %621 = vmatprep.subr.mxu0 0.0
    %v622 = vand.u32 %v53, 4294901760
    %623 = vmatpush1.msra.mxu0 %v622
    %624 = vmatprep.subr.mxu0 0.0
    %v625 = vand.u32 %v54, 4294901760
    %626 = vmatpush1.msra.mxu0 %v625
    %627 = vmatprep.subr.mxu0 0.0
    %v628 = vand.u32 %v55, 4294901760
    %629 = vmatpush1.msra.mxu0 %v628
    %630 = vmatprep.subr.mxu0 0.0
    %v631 = vand.u32 %v56, 4294901760
    %632 = vmatpush1.msra.mxu0 %v631
    %633 = vmatprep.subr.mxu0 0.0
    %v634 = vand.u32 %v57, 4294901760
    %635 = vmatpush1.msra.mxu0 %v634
    %636 = vmatprep.subr.mxu0 0.0
    %v637 = vand.u32 %v58, 4294901760
    %638 = vmatpush1.msra.mxu0 %v637
    %639 = vmatprep.subr.mxu0 0.0
    %v640 = vand.u32 %v59, 4294901760
    %641 = vmatpush1.msra.mxu0 %v640
    %642 = vmatprep.subr.mxu0 0.0
    %v643 = vand.u32 %v60, 4294901760
    %644 = vmatpush1.msra.mxu0 %v643
    %645 = vmatprep.subr.mxu0 0.0
    %v646 = vand.u32 %v61, 4294901760
    %647 = vmatpush1.msra.mxu0 %v646
    %648 = vmatprep.subr.mxu0 0.0
    %v649 = vand.u32 %v62, 4294901760
    %650 = vmatpush1.msra.mxu0 %v649
    %651 = vmatprep.subr.mxu0 0.0
    %v652 = vand.u32 %v63, 4294901760
    %653 = vmatpush1.msra.mxu0 %v652
    %654 = vmatprep.subr.mxu0 0.0
    %v655 = vand.u32 %v64, 4294901760
    %656 = vmatpush1.msra.mxu0 %v655
    %657 = vmatprep.subr.mxu0 0.0
    %v658 = vand.u32 %v65, 4294901760
    %659 = vmatpush1.msra.mxu0 %v658
    %660 = vmatprep.subr.mxu0 0.0
    %v661 = vand.u32 %v66, 4294901760
    %662 = vmatpush1.msra.mxu0 %v661
    %663 = vmatprep.subr.mxu0 0.0
    %v664 = vand.u32 %v67, 4294901760
    %665 = vmatpush1.msra.mxu0 %v664
    %666 = vmatprep.subr.mxu0 0.0
    %v667 = vand.u32 %v68, 4294901760
    %668 = vmatpush1.msra.mxu0 %v667
    %669 = vmatprep.subr.mxu0 0.0
    %v670 = vand.u32 %v69, 4294901760
    %671 = vmatpush1.msra.mxu0 %v670
    %672 = vmatprep.subr.mxu0 0.0
    %v673 = vand.u32 %v70, 4294901760
    %674 = vmatpush1.msra.mxu0 %v673
    %675 = vmatprep.subr.mxu0 0.0
    %v676 = vand.u32 %v71, 4294901760
    %677 = vmatpush1.msra.mxu0 %v676
    %678 = vmatprep.subr.mxu0 0.0
    %v679 = vand.u32 %v72, 4294901760
    %680 = vmatpush1.msra.mxu0 %v679
    %681 = vmatprep.subr.mxu0 0.0
    %v682 = vand.u32 %v73, 4294901760
    %683 = vmatpush1.msra.mxu0 %v682
    %v684 = vand.u32 %v39, 4294901760
    %v685 = vsub.f32 %v39, %v684
    %v686 = vand.u32 %v685, 4294901760
    %687 = vmatprep.mubr.f32.mxu0 %v686
    %v688 = vand.u32 %v38, 4294901760
    %v689 = vsub.f32 %v38, %v688
    %v690 = vand.u32 %v689, 4294901760
    %691 = vmatmul.mubr.f32.gmra.mrb[0].mxu0 %v690
    %v692 = vpop.f32.mrb[0].mxu0
    %v693 = vadd.f32 %v585, %v692
    %v694 = vpop.f32.mrb[0].mxu0
    %695 = vdwg.mxu0
    %696 = vmatprep.subr.mxu0 0.0
    %v697 = vand.u32 %v42, 4294901760
    %v698 = vsub.f32 %v42, %v697
    %v699 = vand.u32 %v698, 4294901760
    %700 = vmatpush1.msra.mxu0 %v699
    %701 = vmatprep.subr.mxu0 0.0
    %v702 = vand.u32 %v43, 4294901760
    %v703 = vsub.f32 %v43, %v702
    %v704 = vand.u32 %v703, 4294901760
    %705 = vmatpush1.msra.mxu0 %v704
    %706 = vmatprep.subr.mxu0 0.0
    %v707 = vand.u32 %v44, 4294901760
    %v708 = vsub.f32 %v44, %v707
    %v709 = vand.u32 %v708, 4294901760
    %710 = vmatpush1.msra.mxu0 %v709
    %711 = vmatprep.subr.mxu0 0.0
    %v712 = vand.u32 %v45, 4294901760
    %v713 = vsub.f32 %v45, %v712
    %v714 = vand.u32 %v713, 4294901760
    %715 = vmatpush1.msra.mxu0 %v714
    %716 = vmatprep.subr.mxu0 0.0
    %v717 = vand.u32 %v46, 4294901760
    %v718 = vsub.f32 %v46, %v717
    %v719 = vand.u32 %v718, 4294901760
    %720 = vmatpush1.msra.mxu0 %v719
    %721 = vmatprep.subr.mxu0 0.0
    %v722 = vand.u32 %v47, 4294901760
    %v723 = vsub.f32 %v47, %v722
    %v724 = vand.u32 %v723, 4294901760
    %725 = vmatpush1.msra.mxu0 %v724
    %726 = vmatprep.subr.mxu0 0.0
    %v727 = vand.u32 %v48, 4294901760
    %v728 = vsub.f32 %v48, %v727
    %v729 = vand.u32 %v728, 4294901760
    %730 = vmatpush1.msra.mxu0 %v729
    %731 = vmatprep.subr.mxu0 0.0
    %v732 = vand.u32 %v49, 4294901760
    %v733 = vsub.f32 %v49, %v732
    %v734 = vand.u32 %v733, 4294901760
    %735 = vmatpush1.msra.mxu0 %v734
    %736 = vmatprep.subr.mxu0 0.0
    %v737 = vand.u32 %v50, 4294901760
    %v738 = vsub.f32 %v50, %v737
    %v739 = vand.u32 %v738, 4294901760
    %740 = vmatpush1.msra.mxu0 %v739
    %741 = vmatprep.subr.mxu0 0.0
    %v742 = vand.u32 %v51, 4294901760
    %v743 = vsub.f32 %v51, %v742
    %v744 = vand.u32 %v743, 4294901760
    %745 = vmatpush1.msra.mxu0 %v744
    %746 = vmatprep.subr.mxu0 0.0
    %v747 = vand.u32 %v52, 4294901760
    %v748 = vsub.f32 %v52, %v747
    %v749 = vand.u32 %v748, 4294901760
    %750 = vmatpush1.msra.mxu0 %v749
    %751 = vmatprep.subr.mxu0 0.0
    %v752 = vand.u32 %v53, 4294901760
    %v753 = vsub.f32 %v53, %v752
    %v754 = vand.u32 %v753, 4294901760
    %755 = vmatpush1.msra.mxu0 %v754
    %756 = vmatprep.subr.mxu0 0.0
    %v757 = vand.u32 %v54, 4294901760
    %v758 = vsub.f32 %v54, %v757
    %v759 = vand.u32 %v758, 4294901760
    %760 = vmatpush1.msra.mxu0 %v759
    %761 = vmatprep.subr.mxu0 0.0
    %v762 = vand.u32 %v55, 4294901760
    %v763 = vsub.f32 %v55, %v762
    %v764 = vand.u32 %v763, 4294901760
    %765 = vmatpush1.msra.mxu0 %v764
    %766 = vmatprep.subr.mxu0 0.0
    %v767 = vand.u32 %v56, 4294901760
    %v768 = vsub.f32 %v56, %v767
    %v769 = vand.u32 %v768, 4294901760
    %770 = vmatpush1.msra.mxu0 %v769
    %771 = vmatprep.subr.mxu0 0.0
    %v772 = vand.u32 %v57, 4294901760
    %v773 = vsub.f32 %v57, %v772
    %v774 = vand.u32 %v773, 4294901760
    %775 = vmatpush1.msra.mxu0 %v774
    %776 = vmatprep.subr.mxu0 0.0
    %v777 = vand.u32 %v58, 4294901760
    %v778 = vsub.f32 %v58, %v777
    %v779 = vand.u32 %v778, 4294901760
    %780 = vmatpush1.msra.mxu0 %v779
    %781 = vmatprep.subr.mxu0 0.0
    %v782 = vand.u32 %v59, 4294901760
    %v783 = vsub.f32 %v59, %v782
    %v784 = vand.u32 %v783, 4294901760
    %785 = vmatpush1.msra.mxu0 %v784
    %786 = vmatprep.subr.mxu0 0.0
    %v787 = vand.u32 %v60, 4294901760
    %v788 = vsub.f32 %v60, %v787
    %v789 = vand.u32 %v788, 4294901760
    %790 = vmatpush1.msra.mxu0 %v789
    %791 = vmatprep.subr.mxu0 0.0
    %v792 = vand.u32 %v61, 4294901760
    %v793 = vsub.f32 %v61, %v792
    %v794 = vand.u32 %v793, 4294901760
    %795 = vmatpush1.msra.mxu0 %v794
    %796 = vmatprep.subr.mxu0 0.0
    %v797 = vand.u32 %v62, 4294901760
    %v798 = vsub.f32 %v62, %v797
    %v799 = vand.u32 %v798, 4294901760
    %800 = vmatpush1.msra.mxu0 %v799
    %801 = vmatprep.subr.mxu0 0.0
    %v802 = vand.u32 %v63, 4294901760
    %v803 = vsub.f32 %v63, %v802
    %v804 = vand.u32 %v803, 4294901760
    %805 = vmatpush1.msra.mxu0 %v804
    %806 = vmatprep.subr.mxu0 0.0
    %v807 = vand.u32 %v64, 4294901760
    %v808 = vsub.f32 %v64, %v807
    %v809 = vand.u32 %v808, 4294901760
    %810 = vmatpush1.msra.mxu0 %v809
    %811 = vmatprep.subr.mxu0 0.0
    %v812 = vand.u32 %v65, 4294901760
    %v813 = vsub.f32 %v65, %v812
    %v814 = vand.u32 %v813, 4294901760
    %815 = vmatpush1.msra.mxu0 %v814
    %816 = vmatprep.subr.mxu0 0.0
    %v817 = vand.u32 %v66, 4294901760
    %v818 = vsub.f32 %v66, %v817
    %v819 = vand.u32 %v818, 4294901760
    %820 = vmatpush1.msra.mxu0 %v819
    %821 = vmatprep.subr.mxu0 0.0
    %v822 = vand.u32 %v67, 4294901760
    %v823 = vsub.f32 %v67, %v822
    %v824 = vand.u32 %v823, 4294901760
    %825 = vmatpush1.msra.mxu0 %v824
    %826 = vmatprep.subr.mxu0 0.0
    %v827 = vand.u32 %v68, 4294901760
    %v828 = vsub.f32 %v68, %v827
    %v829 = vand.u32 %v828, 4294901760
    %830 = vmatpush1.msra.mxu0 %v829
    %831 = vmatprep.subr.mxu0 0.0
    %v832 = vand.u32 %v69, 4294901760
    %v833 = vsub.f32 %v69, %v832
    %v834 = vand.u32 %v833, 4294901760
    %835 = vmatpush1.msra.mxu0 %v834
    %836 = vmatprep.subr.mxu0 0.0
    %v837 = vand.u32 %v70, 4294901760
    %v838 = vsub.f32 %v70, %v837
    %v839 = vand.u32 %v838, 4294901760
    %840 = vmatpush1.msra.mxu0 %v839
    %841 = vmatprep.subr.mxu0 0.0
    %v842 = vand.u32 %v71, 4294901760
    %v843 = vsub.f32 %v71, %v842
    %v844 = vand.u32 %v843, 4294901760
    %845 = vmatpush1.msra.mxu0 %v844
    %846 = vmatprep.subr.mxu0 0.0
    %v847 = vand.u32 %v72, 4294901760
    %v848 = vsub.f32 %v72, %v847
    %v849 = vand.u32 %v848, 4294901760
    %850 = vmatpush1.msra.mxu0 %v849
    %851 = vmatprep.subr.mxu0 0.0
    %v852 = vand.u32 %v73, 4294901760
    %v853 = vsub.f32 %v73, %v852
    %v854 = vand.u32 %v853, 4294901760
    %855 = vmatpush1.msra.mxu0 %v854
    %v856 = vand.u32 %v39, 4294901760
    %857 = vmatprep.mubr.f32.mxu0 %v856
    %v858 = vand.u32 %v38, 4294901760
    %859 = vmatmul.mubr.f32.gmra.mrb[0].mxu0 %v858
    %v860 = vpop.f32.mrb[0].mxu0
    %v861 = vadd.f32 %v693, %v860
    %v862 = vpop.f32.mrb[0].mxu0
    %863 = vdwg.mxu0
    %864 = vmatprep.subr.mxu0 0.0
    %v865 = vand.u32 %v42, 4294901760
    %866 = vmatpush1.msra.mxu0 %v865
    %867 = vmatprep.subr.mxu0 0.0
    %v868 = vand.u32 %v43, 4294901760
    %869 = vmatpush1.msra.mxu0 %v868
    %870 = vmatprep.subr.mxu0 0.0
    %v871 = vand.u32 %v44, 4294901760
    %872 = vmatpush1.msra.mxu0 %v871
    %873 = vmatprep.subr.mxu0 0.0
    %v874 = vand.u32 %v45, 4294901760
    %875 = vmatpush1.msra.mxu0 %v874
    %876 = vmatprep.subr.mxu0 0.0
    %v877 = vand.u32 %v46, 4294901760
    %878 = vmatpush1.msra.mxu0 %v877
    %879 = vmatprep.subr.mxu0 0.0
    %v880 = vand.u32 %v47, 4294901760
    %881 = vmatpush1.msra.mxu0 %v880
    %882 = vmatprep.subr.mxu0 0.0
    %v883 = vand.u32 %v48, 4294901760
    %884 = vmatpush1.msra.mxu0 %v883
    %885 = vmatprep.subr.mxu0 0.0
    %v886 = vand.u32 %v49, 4294901760
    %887 = vmatpush1.msra.mxu0 %v886
    %888 = vmatprep.subr.mxu0 0.0
    %v889 = vand.u32 %v50, 4294901760
    %890 = vmatpush1.msra.mxu0 %v889
    %891 = vmatprep.subr.mxu0 0.0
    %v892 = vand.u32 %v51, 4294901760
    %893 = vmatpush1.msra.mxu0 %v892
    %894 = vmatprep.subr.mxu0 0.0
    %v895 = vand.u32 %v52, 4294901760
    %896 = vmatpush1.msra.mxu0 %v895
    %897 = vmatprep.subr.mxu0 0.0
    %v898 = vand.u32 %v53, 4294901760
    %899 = vmatpush1.msra.mxu0 %v898
    %900 = vmatprep.subr.mxu0 0.0
    %v901 = vand.u32 %v54, 4294901760
    %902 = vmatpush1.msra.mxu0 %v901
    %903 = vmatprep.subr.mxu0 0.0
    %v904 = vand.u32 %v55, 4294901760
    %905 = vmatpush1.msra.mxu0 %v904
    %906 = vmatprep.subr.mxu0 0.0
    %v907 = vand.u32 %v56, 4294901760
    %908 = vmatpush1.msra.mxu0 %v907
    %909 = vmatprep.subr.mxu0 0.0
    %v910 = vand.u32 %v57, 4294901760
    %911 = vmatpush1.msra.mxu0 %v910
    %912 = vmatprep.subr.mxu0 0.0
    %v913 = vand.u32 %v58, 4294901760
    %914 = vmatpush1.msra.mxu0 %v913
    %915 = vmatprep.subr.mxu0 0.0
    %v916 = vand.u32 %v59, 4294901760
    %917 = vmatpush1.msra.mxu0 %v916
    %918 = vmatprep.subr.mxu0 0.0
    %v919 = vand.u32 %v60, 4294901760
    %920 = vmatpush1.msra.mxu0 %v919
    %921 = vmatprep.subr.mxu0 0.0
    %v922 = vand.u32 %v61, 4294901760
    %923 = vmatpush1.msra.mxu0 %v922
    %924 = vmatprep.subr.mxu0 0.0
    %v925 = vand.u32 %v62, 4294901760
    %926 = vmatpush1.msra.mxu0 %v925
    %927 = vmatprep.subr.mxu0 0.0
    %v928 = vand.u32 %v63, 4294901760
    %929 = vmatpush1.msra.mxu0 %v928
    %930 = vmatprep.subr.mxu0 0.0
    %v931 = vand.u32 %v64, 4294901760
    %932 = vmatpush1.msra.mxu0 %v931
    %933 = vmatprep.subr.mxu0 0.0
    %v934 = vand.u32 %v65, 4294901760
    %935 = vmatpush1.msra.mxu0 %v934
    %936 = vmatprep.subr.mxu0 0.0
    %v937 = vand.u32 %v66, 4294901760
    %938 = vmatpush1.msra.mxu0 %v937
    %939 = vmatprep.subr.mxu0 0.0
    %v940 = vand.u32 %v67, 4294901760
    %941 = vmatpush1.msra.mxu0 %v940
    %942 = vmatprep.subr.mxu0 0.0
    %v943 = vand.u32 %v68, 4294901760
    %944 = vmatpush1.msra.mxu0 %v943
    %945 = vmatprep.subr.mxu0 0.0
    %v946 = vand.u32 %v69, 4294901760
    %947 = vmatpush1.msra.mxu0 %v946
    %948 = vmatprep.subr.mxu0 0.0
    %v949 = vand.u32 %v70, 4294901760
    %950 = vmatpush1.msra.mxu0 %v949
    %951 = vmatprep.subr.mxu0 0.0
    %v952 = vand.u32 %v71, 4294901760
    %953 = vmatpush1.msra.mxu0 %v952
    %954 = vmatprep.subr.mxu0 0.0
    %v955 = vand.u32 %v72, 4294901760
    %956 = vmatpush1.msra.mxu0 %v955
    %957 = vmatprep.subr.mxu0 0.0
    %v958 = vand.u32 %v73, 4294901760
    %959 = vmatpush1.msra.mxu0 %v958
    %v960 = vand.u32 %v39, 4294901760
    %961 = vmatprep.mubr.f32.mxu0 %v960
    %v962 = vand.u32 %v38, 4294901760
    %963 = vmatmul.mubr.f32.gmra.mrb[0].mxu0 %v962
    %v964 = vpop.f32.mrb[0].mxu0
    %v965 = vadd.f32 %v861, %v964
    %v966 = vpop.f32.mrb[0].mxu0
    %967 = vdwg.mxu0
    %968 = vmatprep.subr.mxu0 0.0
    %v969 = vand.u32 %v74, 4294901760
    %970 = vmatpush1.msra.mxu0 %v969
    %971 = vmatprep.subr.mxu0 0.0
    %v972 = vand.u32 %v75, 4294901760
    %973 = vmatpush1.msra.mxu0 %v972
    %974 = vmatprep.subr.mxu0 0.0
    %v975 = vand.u32 %v76, 4294901760
    %976 = vmatpush1.msra.mxu0 %v975
    %977 = vmatprep.subr.mxu0 0.0
    %v978 = vand.u32 %v77, 4294901760
    %979 = vmatpush1.msra.mxu0 %v978
    %980 = vmatprep.subr.mxu0 0.0
    %v981 = vand.u32 %v78, 4294901760
    %982 = vmatpush1.msra.mxu0 %v981
    %983 = vmatprep.subr.mxu0 0.0
    %v984 = vand.u32 %v79, 4294901760
    %985 = vmatpush1.msra.mxu0 %v984
    %986 = vmatprep.subr.mxu0 0.0
    %v987 = vand.u32 %v80, 4294901760
    %988 = vmatpush1.msra.mxu0 %v987
    %989 = vmatprep.subr.mxu0 0.0
    %v990 = vand.u32 %v81, 4294901760
    %991 = vmatpush1.msra.mxu0 %v990
    %992 = vmatprep.subr.mxu0 0.0
    %v993 = vand.u32 %v82, 4294901760
    %994 = vmatpush1.msra.mxu0 %v993
    %995 = vmatprep.subr.mxu0 0.0
    %v996 = vand.u32 %v83, 4294901760
    %997 = vmatpush1.msra.mxu0 %v996
    %998 = vmatprep.subr.mxu0 0.0
    %v999 = vand.u32 %v84, 4294901760
    %1000 = vmatpush1.msra.mxu0 %v999
    %1001 = vmatprep.subr.mxu0 0.0
    %v1002 = vand.u32 %v85, 4294901760
    %1003 = vmatpush1.msra.mxu0 %v1002
    %1004 = vmatprep.subr.mxu0 0.0
    %v1005 = vand.u32 %v86, 4294901760
    %1006 = vmatpush1.msra.mxu0 %v1005
    %1007 = vmatprep.subr.mxu0 0.0
    %v1008 = vand.u32 %v87, 4294901760
    %1009 = vmatpush1.msra.mxu0 %v1008
    %1010 = vmatprep.subr.mxu0 0.0
    %v1011 = vand.u32 %v88, 4294901760
    %1012 = vmatpush1.msra.mxu0 %v1011
    %1013 = vmatprep.subr.mxu0 0.0
    %v1014 = vand.u32 %v89, 4294901760
    %1015 = vmatpush1.msra.mxu0 %v1014
    %1016 = vmatprep.subr.mxu0 0.0
    %v1017 = vand.u32 %v90, 4294901760
    %1018 = vmatpush1.msra.mxu0 %v1017
    %1019 = vmatprep.subr.mxu0 0.0
    %v1020 = vand.u32 %v91, 4294901760
    %1021 = vmatpush1.msra.mxu0 %v1020
    %1022 = vmatprep.subr.mxu0 0.0
    %v1023 = vand.u32 %v92, 4294901760
    %1024 = vmatpush1.msra.mxu0 %v1023
    %1025 = vmatprep.subr.mxu0 0.0
    %v1026 = vand.u32 %v93, 4294901760
    %1027 = vmatpush1.msra.mxu0 %v1026
    %1028 = vmatprep.subr.mxu0 0.0
    %v1029 = vand.u32 %v94, 4294901760
    %1030 = vmatpush1.msra.mxu0 %v1029
    %1031 = vmatprep.subr.mxu0 0.0
    %v1032 = vand.u32 %v95, 4294901760
    %1033 = vmatpush1.msra.mxu0 %v1032
    %1034 = vmatprep.subr.mxu0 0.0
    %v1035 = vand.u32 %v96, 4294901760
    %1036 = vmatpush1.msra.mxu0 %v1035
    %1037 = vmatprep.subr.mxu0 0.0
    %v1038 = vand.u32 %v97, 4294901760
    %1039 = vmatpush1.msra.mxu0 %v1038
    %1040 = vmatprep.subr.mxu0 0.0
    %v1041 = vand.u32 %v98, 4294901760
    %1042 = vmatpush1.msra.mxu0 %v1041
    %1043 = vmatprep.subr.mxu0 0.0
    %v1044 = vand.u32 %v99, 4294901760
    %1045 = vmatpush1.msra.mxu0 %v1044
    %1046 = vmatprep.subr.mxu0 0.0
    %v1047 = vand.u32 %v100, 4294901760
    %1048 = vmatpush1.msra.mxu0 %v1047
    %1049 = vmatprep.subr.mxu0 0.0
    %v1050 = vand.u32 %v101, 4294901760
    %1051 = vmatpush1.msra.mxu0 %v1050
    %1052 = vmatprep.subr.mxu0 0.0
    %v1053 = vand.u32 %v102, 4294901760
    %1054 = vmatpush1.msra.mxu0 %v1053
    %1055 = vmatprep.subr.mxu0 0.0
    %v1056 = vand.u32 %v103, 4294901760
    %1057 = vmatpush1.msra.mxu0 %v1056
    %1058 = vmatprep.subr.mxu0 0.0
    %v1059 = vand.u32 %v104, 4294901760
    %1060 = vmatpush1.msra.mxu0 %v1059
    %1061 = vmatprep.subr.mxu0 0.0
    %v1062 = vand.u32 %v105, 4294901760
    %1063 = vmatpush1.msra.mxu0 %v1062
    %v1064 = vand.u32 %v41, 4294901760
    %v1065 = vsub.f32 %v41, %v1064
    %v1066 = vand.u32 %v1065, 4294901760
    %v1067 = vsub.f32 %v1065, %v1066
    %v1068 = vand.u32 %v1067, 4294901760
    %1069 = vmatprep.mubr.f32.mxu0 %v1068
    %v1070 = vand.u32 %v40, 4294901760
    %v1071 = vsub.f32 %v40, %v1070
    %v1072 = vand.u32 %v1071, 4294901760
    %v1073 = vsub.f32 %v1071, %v1072
    %v1074 = vand.u32 %v1073, 4294901760
    %1075 = vmatmul.mubr.f32.gmra.mrb[0].mxu0 %v1074
    %v1076 = vpop.f32.mrb[0].mxu0
    %v1077 = vadd.f32 %v965, %v1076
    %v1078 = vpop.f32.mrb[0].mxu0
    %1079 = vdwg.mxu0
    %1080 = vmatprep.subr.mxu0 0.0
    %v1081 = vand.u32 %v74, 4294901760
    %v1082 = vsub.f32 %v74, %v1081
    %v1083 = vand.u32 %v1082, 4294901760
    %v1084 = vsub.f32 %v1082, %v1083
    %v1085 = vand.u32 %v1084, 4294901760
    %1086 = vmatpush1.msra.mxu0 %v1085
    %1087 = vmatprep.subr.mxu0 0.0
    %v1088 = vand.u32 %v75, 4294901760
    %v1089 = vsub.f32 %v75, %v1088
    %v1090 = vand.u32 %v1089, 4294901760
    %v1091 = vsub.f32 %v1089, %v1090
    %v1092 = vand.u32 %v1091, 4294901760
    %1093 = vmatpush1.msra.mxu0 %v1092
    %1094 = vmatprep.subr.mxu0 0.0
    %v1095 = vand.u32 %v76, 4294901760
    %v1096 = vsub.f32 %v76, %v1095
    %v1097 = vand.u32 %v1096, 4294901760
    %v1098 = vsub.f32 %v1096, %v1097
    %v1099 = vand.u32 %v1098, 4294901760
    %1100 = vmatpush1.msra.mxu0 %v1099
    %1101 = vmatprep.subr.mxu0 0.0
    %v1102 = vand.u32 %v77, 4294901760
    %v1103 = vsub.f32 %v77, %v1102
    %v1104 = vand.u32 %v1103, 4294901760
    %v1105 = vsub.f32 %v1103, %v1104
    %v1106 = vand.u32 %v1105, 4294901760
    %1107 = vmatpush1.msra.mxu0 %v1106
    %1108 = vmatprep.subr.mxu0 0.0
    %v1109 = vand.u32 %v78, 4294901760
    %v1110 = vsub.f32 %v78, %v1109
    %v1111 = vand.u32 %v1110, 4294901760
    %v1112 = vsub.f32 %v1110, %v1111
    %v1113 = vand.u32 %v1112, 4294901760
    %1114 = vmatpush1.msra.mxu0 %v1113
    %1115 = vmatprep.subr.mxu0 0.0
    %v1116 = vand.u32 %v79, 4294901760
    %v1117 = vsub.f32 %v79, %v1116
    %v1118 = vand.u32 %v1117, 4294901760
    %v1119 = vsub.f32 %v1117, %v1118
    %v1120 = vand.u32 %v1119, 4294901760
    %1121 = vmatpush1.msra.mxu0 %v1120
    %1122 = vmatprep.subr.mxu0 0.0
    %v1123 = vand.u32 %v80, 4294901760
    %v1124 = vsub.f32 %v80, %v1123
    %v1125 = vand.u32 %v1124, 4294901760
    %v1126 = vsub.f32 %v1124, %v1125
    %v1127 = vand.u32 %v1126, 4294901760
    %1128 = vmatpush1.msra.mxu0 %v1127
    %1129 = vmatprep.subr.mxu0 0.0
    %v1130 = vand.u32 %v81, 4294901760
    %v1131 = vsub.f32 %v81, %v1130
    %v1132 = vand.u32 %v1131, 4294901760
    %v1133 = vsub.f32 %v1131, %v1132
    %v1134 = vand.u32 %v1133, 4294901760
    %1135 = vmatpush1.msra.mxu0 %v1134
    %1136 = vmatprep.subr.mxu0 0.0
    %v1137 = vand.u32 %v82, 4294901760
    %v1138 = vsub.f32 %v82, %v1137
    %v1139 = vand.u32 %v1138, 4294901760
    %v1140 = vsub.f32 %v1138, %v1139
    %v1141 = vand.u32 %v1140, 4294901760
    %1142 = vmatpush1.msra.mxu0 %v1141
    %1143 = vmatprep.subr.mxu0 0.0
    %v1144 = vand.u32 %v83, 4294901760
    %v1145 = vsub.f32 %v83, %v1144
    %v1146 = vand.u32 %v1145, 4294901760
    %v1147 = vsub.f32 %v1145, %v1146
    %v1148 = vand.u32 %v1147, 4294901760
    %1149 = vmatpush1.msra.mxu0 %v1148
    %1150 = vmatprep.subr.mxu0 0.0
    %v1151 = vand.u32 %v84, 4294901760
    %v1152 = vsub.f32 %v84, %v1151
    %v1153 = vand.u32 %v1152, 4294901760
    %v1154 = vsub.f32 %v1152, %v1153
    %v1155 = vand.u32 %v1154, 4294901760
    %1156 = vmatpush1.msra.mxu0 %v1155
    %1157 = vmatprep.subr.mxu0 0.0
    %v1158 = vand.u32 %v85, 4294901760
    %v1159 = vsub.f32 %v85, %v1158
    %v1160 = vand.u32 %v1159, 4294901760
    %v1161 = vsub.f32 %v1159, %v1160
    %v1162 = vand.u32 %v1161, 4294901760
    %1163 = vmatpush1.msra.mxu0 %v1162
    %1164 = vmatprep.subr.mxu0 0.0
    %v1165 = vand.u32 %v86, 4294901760
    %v1166 = vsub.f32 %v86, %v1165
    %v1167 = vand.u32 %v1166, 4294901760
    %v1168 = vsub.f32 %v1166, %v1167
    %v1169 = vand.u32 %v1168, 4294901760
    %1170 = vmatpush1.msra.mxu0 %v1169
    %1171 = vmatprep.subr.mxu0 0.0
    %v1172 = vand.u32 %v87, 4294901760
    %v1173 = vsub.f32 %v87, %v1172
    %v1174 = vand.u32 %v1173, 4294901760
    %v1175 = vsub.f32 %v1173, %v1174
    %v1176 = vand.u32 %v1175, 4294901760
    %1177 = vmatpush1.msra.mxu0 %v1176
    %1178 = vmatprep.subr.mxu0 0.0
    %v1179 = vand.u32 %v88, 4294901760
    %v1180 = vsub.f32 %v88, %v1179
    %v1181 = vand.u32 %v1180, 4294901760
    %v1182 = vsub.f32 %v1180, %v1181
    %v1183 = vand.u32 %v1182, 4294901760
    %1184 = vmatpush1.msra.mxu0 %v1183
    %1185 = vmatprep.subr.mxu0 0.0
    %v1186 = vand.u32 %v89, 4294901760
    %v1187 = vsub.f32 %v89, %v1186
    %v1188 = vand.u32 %v1187, 4294901760
    %v1189 = vsub.f32 %v1187, %v1188
    %v1190 = vand.u32 %v1189, 4294901760
    %1191 = vmatpush1.msra.mxu0 %v1190
    %1192 = vmatprep.subr.mxu0 0.0
    %v1193 = vand.u32 %v90, 4294901760
    %v1194 = vsub.f32 %v90, %v1193
    %v1195 = vand.u32 %v1194, 4294901760
    %v1196 = vsub.f32 %v1194, %v1195
    %v1197 = vand.u32 %v1196, 4294901760
    %1198 = vmatpush1.msra.mxu0 %v1197
    %1199 = vmatprep.subr.mxu0 0.0
    %v1200 = vand.u32 %v91, 4294901760
    %v1201 = vsub.f32 %v91, %v1200
    %v1202 = vand.u32 %v1201, 4294901760
    %v1203 = vsub.f32 %v1201, %v1202
    %v1204 = vand.u32 %v1203, 4294901760
    %1205 = vmatpush1.msra.mxu0 %v1204
    %1206 = vmatprep.subr.mxu0 0.0
    %v1207 = vand.u32 %v92, 4294901760
    %v1208 = vsub.f32 %v92, %v1207
    %v1209 = vand.u32 %v1208, 4294901760
    %v1210 = vsub.f32 %v1208, %v1209
    %v1211 = vand.u32 %v1210, 4294901760
    %1212 = vmatpush1.msra.mxu0 %v1211
    %1213 = vmatprep.subr.mxu0 0.0
    %v1214 = vand.u32 %v93, 4294901760
    %v1215 = vsub.f32 %v93, %v1214
    %v1216 = vand.u32 %v1215, 4294901760
    %v1217 = vsub.f32 %v1215, %v1216
    %v1218 = vand.u32 %v1217, 4294901760
    %1219 = vmatpush1.msra.mxu0 %v1218
    %1220 = vmatprep.subr.mxu0 0.0
    %v1221 = vand.u32 %v94, 4294901760
    %v1222 = vsub.f32 %v94, %v1221
    %v1223 = vand.u32 %v1222, 4294901760
    %v1224 = vsub.f32 %v1222, %v1223
    %v1225 = vand.u32 %v1224, 4294901760
    %1226 = vmatpush1.msra.mxu0 %v1225
    %1227 = vmatprep.subr.mxu0 0.0
    %v1228 = vand.u32 %v95, 4294901760
    %v1229 = vsub.f32 %v95, %v1228
    %v1230 = vand.u32 %v1229, 4294901760
    %v1231 = vsub.f32 %v1229, %v1230
    %v1232 = vand.u32 %v1231, 4294901760
    %1233 = vmatpush1.msra.mxu0 %v1232
    %1234 = vmatprep.subr.mxu0 0.0
    %v1235 = vand.u32 %v96, 4294901760
    %v1236 = vsub.f32 %v96, %v1235
    %v1237 = vand.u32 %v1236, 4294901760
    %v1238 = vsub.f32 %v1236, %v1237
    %v1239 = vand.u32 %v1238, 4294901760
    %1240 = vmatpush1.msra.mxu0 %v1239
    %1241 = vmatprep.subr.mxu0 0.0
    %v1242 = vand.u32 %v97, 4294901760
    %v1243 = vsub.f32 %v97, %v1242
    %v1244 = vand.u32 %v1243, 4294901760
    %v1245 = vsub.f32 %v1243, %v1244
    %v1246 = vand.u32 %v1245, 4294901760
    %1247 = vmatpush1.msra.mxu0 %v1246
    %1248 = vmatprep.subr.mxu0 0.0
    %v1249 = vand.u32 %v98, 4294901760
    %v1250 = vsub.f32 %v98, %v1249
    %v1251 = vand.u32 %v1250, 4294901760
    %v1252 = vsub.f32 %v1250, %v1251
    %v1253 = vand.u32 %v1252, 4294901760
    %1254 = vmatpush1.msra.mxu0 %v1253
    %1255 = vmatprep.subr.mxu0 0.0
    %v1256 = vand.u32 %v99, 4294901760
    %v1257 = vsub.f32 %v99, %v1256
    %v1258 = vand.u32 %v1257, 4294901760
    %v1259 = vsub.f32 %v1257, %v1258
    %v1260 = vand.u32 %v1259, 4294901760
    %1261 = vmatpush1.msra.mxu0 %v1260
    %1262 = vmatprep.subr.mxu0 0.0
    %v1263 = vand.u32 %v100, 4294901760
    %v1264 = vsub.f32 %v100, %v1263
    %v1265 = vand.u32 %v1264, 4294901760
    %v1266 = vsub.f32 %v1264, %v1265
    %v1267 = vand.u32 %v1266, 4294901760
    %1268 = vmatpush1.msra.mxu0 %v1267
    %1269 = vmatprep.subr.mxu0 0.0
    %v1270 = vand.u32 %v101, 4294901760
    %v1271 = vsub.f32 %v101, %v1270
    %v1272 = vand.u32 %v1271, 4294901760
    %v1273 = vsub.f32 %v1271, %v1272
    %v1274 = vand.u32 %v1273, 4294901760
    %1275 = vmatpush1.msra.mxu0 %v1274
    %1276 = vmatprep.subr.mxu0 0.0
    %v1277 = vand.u32 %v102, 4294901760
    %v1278 = vsub.f32 %v102, %v1277
    %v1279 = vand.u32 %v1278, 4294901760
    %v1280 = vsub.f32 %v1278, %v1279
    %v1281 = vand.u32 %v1280, 4294901760
    %1282 = vmatpush1.msra.mxu0 %v1281
    %1283 = vmatprep.subr.mxu0 0.0
    %v1284 = vand.u32 %v103, 4294901760
    %v1285 = vsub.f32 %v103, %v1284
    %v1286 = vand.u32 %v1285, 4294901760
    %v1287 = vsub.f32 %v1285, %v1286
    %v1288 = vand.u32 %v1287, 4294901760
    %1289 = vmatpush1.msra.mxu0 %v1288
    %1290 = vmatprep.subr.mxu0 0.0
    %v1291 = vand.u32 %v104, 4294901760
    %v1292 = vsub.f32 %v104, %v1291
    %v1293 = vand.u32 %v1292, 4294901760
    %v1294 = vsub.f32 %v1292, %v1293
    %v1295 = vand.u32 %v1294, 4294901760
    %1296 = vmatpush1.msra.mxu0 %v1295
    %1297 = vmatprep.subr.mxu0 0.0
    %v1298 = vand.u32 %v105, 4294901760
    %v1299 = vsub.f32 %v105, %v1298
    %v1300 = vand.u32 %v1299, 4294901760
    %v1301 = vsub.f32 %v1299, %v1300
    %v1302 = vand.u32 %v1301, 4294901760
    %1303 = vmatpush1.msra.mxu0 %v1302
    %v1304 = vand.u32 %v41, 4294901760
    %1305 = vmatprep.mubr.f32.mxu0 %v1304
    %v1306 = vand.u32 %v40, 4294901760
    %1307 = vmatmul.mubr.f32.gmra.mrb[0].mxu0 %v1306
    %v1308 = vpop.f32.mrb[0].mxu0
    %v1309 = vadd.f32 %v1077, %v1308
    %v1310 = vpop.f32.mrb[0].mxu0
    %1311 = vdwg.mxu0
    %1312 = vmatprep.subr.mxu0 0.0
    %v1313 = vand.u32 %v74, 4294901760
    %v1314 = vsub.f32 %v74, %v1313
    %1315 = vmatpush1.msra.mxu0 %v1314
    %1316 = vmatprep.subr.mxu0 0.0
    %v1317 = vand.u32 %v75, 4294901760
    %v1318 = vsub.f32 %v75, %v1317
    %1319 = vmatpush1.msra.mxu0 %v1318
    %1320 = vmatprep.subr.mxu0 0.0
    %v1321 = vand.u32 %v76, 4294901760
    %v1322 = vsub.f32 %v76, %v1321
    %1323 = vmatpush1.msra.mxu0 %v1322
    %1324 = vmatprep.subr.mxu0 0.0
    %v1325 = vand.u32 %v77, 4294901760
    %v1326 = vsub.f32 %v77, %v1325
    %1327 = vmatpush1.msra.mxu0 %v1326
    %1328 = vmatprep.subr.mxu0 0.0
    %v1329 = vand.u32 %v78, 4294901760
    %v1330 = vsub.f32 %v78, %v1329
    %1331 = vmatpush1.msra.mxu0 %v1330
    %1332 = vmatprep.subr.mxu0 0.0
    %v1333 = vand.u32 %v79, 4294901760
    %v1334 = vsub.f32 %v79, %v1333
    %1335 = vmatpush1.msra.mxu0 %v1334
    %1336 = vmatprep.subr.mxu0 0.0
    %v1337 = vand.u32 %v80, 4294901760
    %v1338 = vsub.f32 %v80, %v1337
    %1339 = vmatpush1.msra.mxu0 %v1338
    %1340 = vmatprep.subr.mxu0 0.0
    %v1341 = vand.u32 %v81, 4294901760
    %v1342 = vsub.f32 %v81, %v1341
    %1343 = vmatpush1.msra.mxu0 %v1342
    %1344 = vmatprep.subr.mxu0 0.0
    %v1345 = vand.u32 %v82, 4294901760
    %v1346 = vsub.f32 %v82, %v1345
    %1347 = vmatpush1.msra.mxu0 %v1346
    %1348 = vmatprep.subr.mxu0 0.0
    %v1349 = vand.u32 %v83, 4294901760
    %v1350 = vsub.f32 %v83, %v1349
    %1351 = vmatpush1.msra.mxu0 %v1350
    %1352 = vmatprep.subr.mxu0 0.0
    %v1353 = vand.u32 %v84, 4294901760
    %v1354 = vsub.f32 %v84, %v1353
    %1355 = vmatpush1.msra.mxu0 %v1354
    %1356 = vmatprep.subr.mxu0 0.0
    %v1357 = vand.u32 %v85, 4294901760
    %v1358 = vsub.f32 %v85, %v1357
    %1359 = vmatpush1.msra.mxu0 %v1358
    %1360 = vmatprep.subr.mxu0 0.0
    %v1361 = vand.u32 %v86, 4294901760
    %v1362 = vsub.f32 %v86, %v1361
    %1363 = vmatpush1.msra.mxu0 %v1362
    %1364 = vmatprep.subr.mxu0 0.0
    %v1365 = vand.u32 %v87, 4294901760
    %v1366 = vsub.f32 %v87, %v1365
    %1367 = vmatpush1.msra.mxu0 %v1366
    %1368 = vmatprep.subr.mxu0 0.0
    %v1369 = vand.u32 %v88, 4294901760
    %v1370 = vsub.f32 %v88, %v1369
    %1371 = vmatpush1.msra.mxu0 %v1370
    %1372 = vmatprep.subr.mxu0 0.0
    %v1373 = vand.u32 %v89, 4294901760
    %v1374 = vsub.f32 %v89, %v1373
    %1375 = vmatpush1.msra.mxu0 %v1374
    %1376 = vmatprep.subr.mxu0 0.0
    %v1377 = vand.u32 %v90, 4294901760
    %v1378 = vsub.f32 %v90, %v1377
    %1379 = vmatpush1.msra.mxu0 %v1378
    %1380 = vmatprep.subr.mxu0 0.0
    %v1381 = vand.u32 %v91, 4294901760
    %v1382 = vsub.f32 %v91, %v1381
    %1383 = vmatpush1.msra.mxu0 %v1382
    %1384 = vmatprep.subr.mxu0 0.0
    %v1385 = vand.u32 %v92, 4294901760
    %v1386 = vsub.f32 %v92, %v1385
    %1387 = vmatpush1.msra.mxu0 %v1386
    %1388 = vmatprep.subr.mxu0 0.0
    %v1389 = vand.u32 %v93, 4294901760
    %v1390 = vsub.f32 %v93, %v1389
    %1391 = vmatpush1.msra.mxu0 %v1390
    %1392 = vmatprep.subr.mxu0 0.0
    %v1393 = vand.u32 %v94, 4294901760
    %v1394 = vsub.f32 %v94, %v1393
    %1395 = vmatpush1.msra.mxu0 %v1394
    %1396 = vmatprep.subr.mxu0 0.0
    %v1397 = vand.u32 %v95, 4294901760
    %v1398 = vsub.f32 %v95, %v1397
    %1399 = vmatpush1.msra.mxu0 %v1398
    %1400 = vmatprep.subr.mxu0 0.0
    %v1401 = vand.u32 %v96, 4294901760
    %v1402 = vsub.f32 %v96, %v1401
    %1403 = vmatpush1.msra.mxu0 %v1402
    %1404 = vmatprep.subr.mxu0 0.0
    %v1405 = vand.u32 %v97, 4294901760
    %v1406 = vsub.f32 %v97, %v1405
    %1407 = vmatpush1.msra.mxu0 %v1406
    %1408 = vmatprep.subr.mxu0 0.0
    %v1409 = vand.u32 %v98, 4294901760
    %v1410 = vsub.f32 %v98, %v1409
    %1411 = vmatpush1.msra.mxu0 %v1410
    %1412 = vmatprep.subr.mxu0 0.0
    %v1413 = vand.u32 %v99, 4294901760
    %v1414 = vsub.f32 %v99, %v1413
    %1415 = vmatpush1.msra.mxu0 %v1414
    %1416 = vmatprep.subr.mxu0 0.0
    %v1417 = vand.u32 %v100, 4294901760
    %v1418 = vsub.f32 %v100, %v1417
    %1419 = vmatpush1.msra.mxu0 %v1418
    %1420 = vmatprep.subr.mxu0 0.0
    %v1421 = vand.u32 %v101, 4294901760
    %v1422 = vsub.f32 %v101, %v1421
    %1423 = vmatpush1.msra.mxu0 %v1422
    %1424 = vmatprep.subr.mxu0 0.0
    %v1425 = vand.u32 %v102, 4294901760
    %v1426 = vsub.f32 %v102, %v1425
    %1427 = vmatpush1.msra.mxu0 %v1426
    %1428 = vmatprep.subr.mxu0 0.0
    %v1429 = vand.u32 %v103, 4294901760
    %v1430 = vsub.f32 %v103, %v1429
    %1431 = vmatpush1.msra.mxu0 %v1430
    %1432 = vmatprep.subr.mxu0 0.0
    %v1433 = vand.u32 %v104, 4294901760
    %v1434 = vsub.f32 %v104, %v1433
    %1435 = vmatpush1.msra.mxu0 %v1434
    %1436 = vmatprep.subr.mxu0 0.0
    %v1437 = vand.u32 %v105, 4294901760
    %v1438 = vsub.f32 %v105, %v1437
    %1439 = vmatpush1.msra.mxu0 %v1438
    %v1440 = vand.u32 %v41, 4294901760
    %v1441 = vsub.f32 %v41, %v1440
    %1442 = vmatprep.mubr.f32.mxu0 %v1441
    %v1443 = vand.u32 %v40, 4294901760
    %v1444 = vsub.f32 %v40, %v1443
    %1445 = vmatmul.mubr.f32.gmra.mrb[0].mxu0 %v1444
    %v1446 = vpop.f32.mrb[0].mxu0
    %v1447 = vadd.f32 %v1309, %v1446
    %v1448 = vpop.f32.mrb[0].mxu0
    %1449 = vdwg.mxu0
    %1450 = vmatprep.subr.mxu0 0.0
    %v1451 = vand.u32 %v74, 4294901760
    %1452 = vmatpush1.msra.mxu0 %v1451
    %1453 = vmatprep.subr.mxu0 0.0
    %v1454 = vand.u32 %v75, 4294901760
    %1455 = vmatpush1.msra.mxu0 %v1454
    %1456 = vmatprep.subr.mxu0 0.0
    %v1457 = vand.u32 %v76, 4294901760
    %1458 = vmatpush1.msra.mxu0 %v1457
    %1459 = vmatprep.subr.mxu0 0.0
    %v1460 = vand.u32 %v77, 4294901760
    %1461 = vmatpush1.msra.mxu0 %v1460
    %1462 = vmatprep.subr.mxu0 0.0
    %v1463 = vand.u32 %v78, 4294901760
    %1464 = vmatpush1.msra.mxu0 %v1463
    %1465 = vmatprep.subr.mxu0 0.0
    %v1466 = vand.u32 %v79, 4294901760
    %1467 = vmatpush1.msra.mxu0 %v1466
    %1468 = vmatprep.subr.mxu0 0.0
    %v1469 = vand.u32 %v80, 4294901760
    %1470 = vmatpush1.msra.mxu0 %v1469
    %1471 = vmatprep.subr.mxu0 0.0
    %v1472 = vand.u32 %v81, 4294901760
    %1473 = vmatpush1.msra.mxu0 %v1472
    %1474 = vmatprep.subr.mxu0 0.0
    %v1475 = vand.u32 %v82, 4294901760
    %1476 = vmatpush1.msra.mxu0 %v1475
    %1477 = vmatprep.subr.mxu0 0.0
    %v1478 = vand.u32 %v83, 4294901760
    %1479 = vmatpush1.msra.mxu0 %v1478
    %1480 = vmatprep.subr.mxu0 0.0
    %v1481 = vand.u32 %v84, 4294901760
    %1482 = vmatpush1.msra.mxu0 %v1481
    %1483 = vmatprep.subr.mxu0 0.0
    %v1484 = vand.u32 %v85, 4294901760
    %1485 = vmatpush1.msra.mxu0 %v1484
    %1486 = vmatprep.subr.mxu0 0.0
    %v1487 = vand.u32 %v86, 4294901760
    %1488 = vmatpush1.msra.mxu0 %v1487
    %1489 = vmatprep.subr.mxu0 0.0
    %v1490 = vand.u32 %v87, 4294901760
    %1491 = vmatpush1.msra.mxu0 %v1490
    %1492 = vmatprep.subr.mxu0 0.0
    %v1493 = vand.u32 %v88, 4294901760
    %1494 = vmatpush1.msra.mxu0 %v1493
    %1495 = vmatprep.subr.mxu0 0.0
    %v1496 = vand.u32 %v89, 4294901760
    %1497 = vmatpush1.msra.mxu0 %v1496
    %1498 = vmatprep.subr.mxu0 0.0
    %v1499 = vand.u32 %v90, 4294901760
    %1500 = vmatpush1.msra.mxu0 %v1499
    %1501 = vmatprep.subr.mxu0 0.0
    %v1502 = vand.u32 %v91, 4294901760
    %1503 = vmatpush1.msra.mxu0 %v1502
    %1504 = vmatprep.subr.mxu0 0.0
    %v1505 = vand.u32 %v92, 4294901760
    %1506 = vmatpush1.msra.mxu0 %v1505
    %1507 = vmatprep.subr.mxu0 0.0
    %v1508 = vand.u32 %v93, 4294901760
    %1509 = vmatpush1.msra.mxu0 %v1508
    %1510 = vmatprep.subr.mxu0 0.0
    %v1511 = vand.u32 %v94, 4294901760
    %1512 = vmatpush1.msra.mxu0 %v1511
    %1513 = vmatprep.subr.mxu0 0.0
    %v1514 = vand.u32 %v95, 4294901760
    %1515 = vmatpush1.msra.mxu0 %v1514
    %1516 = vmatprep.subr.mxu0 0.0
    %v1517 = vand.u32 %v96, 4294901760
    %1518 = vmatpush1.msra.mxu0 %v1517
    %1519 = vmatprep.subr.mxu0 0.0
    %v1520 = vand.u32 %v97, 4294901760
    %1521 = vmatpush1.msra.mxu0 %v1520
    %1522 = vmatprep.subr.mxu0 0.0
    %v1523 = vand.u32 %v98, 4294901760
    %1524 = vmatpush1.msra.mxu0 %v1523
    %1525 = vmatprep.subr.mxu0 0.0
    %v1526 = vand.u32 %v99, 4294901760
    %1527 = vmatpush1.msra.mxu0 %v1526
    %1528 = vmatprep.subr.mxu0 0.0
    %v1529 = vand.u32 %v100, 4294901760
    %1530 = vmatpush1.msra.mxu0 %v1529
    %1531 = vmatprep.subr.mxu0 0.0
    %v1532 = vand.u32 %v101, 4294901760
    %1533 = vmatpush1.msra.mxu0 %v1532
    %1534 = vmatprep.subr.mxu0 0.0
    %v1535 = vand.u32 %v102, 4294901760
    %1536 = vmatpush1.msra.mxu0 %v1535
    %1537 = vmatprep.subr.mxu0 0.0
    %v1538 = vand.u32 %v103, 4294901760
    %1539 = vmatpush1.msra.mxu0 %v1538
    %1540 = vmatprep.subr.mxu0 0.0
    %v1541 = vand.u32 %v104, 4294901760
    %1542 = vmatpush1.msra.mxu0 %v1541
    %1543 = vmatprep.subr.mxu0 0.0
    %v1544 = vand.u32 %v105, 4294901760
    %1545 = vmatpush1.msra.mxu0 %v1544
    %v1546 = vand.u32 %v41, 4294901760
    %v1547 = vsub.f32 %v41, %v1546
    %v1548 = vand.u32 %v1547, 4294901760
    %1549 = vmatprep.mubr.f32.mxu0 %v1548
    %v1550 = vand.u32 %v40, 4294901760
    %v1551 = vsub.f32 %v40, %v1550
    %v1552 = vand.u32 %v1551, 4294901760
    %1553 = vmatmul.mubr.f32.gmra.mrb[0].mxu0 %v1552
    %v1554 = vpop.f32.mrb[0].mxu0
    %v1555 = vadd.f32 %v1447, %v1554
    %v1556 = vpop.f32.mrb[0].mxu0
    %1557 = vdwg.mxu0
    %1558 = vmatprep.subr.mxu0 0.0
    %v1559 = vand.u32 %v74, 4294901760
    %v1560 = vsub.f32 %v74, %v1559
    %v1561 = vand.u32 %v1560, 4294901760
    %1562 = vmatpush1.msra.mxu0 %v1561
    %1563 = vmatprep.subr.mxu0 0.0
    %v1564 = vand.u32 %v75, 4294901760
    %v1565 = vsub.f32 %v75, %v1564
    %v1566 = vand.u32 %v1565, 4294901760
    %1567 = vmatpush1.msra.mxu0 %v1566
    %1568 = vmatprep.subr.mxu0 0.0
    %v1569 = vand.u32 %v76, 4294901760
    %v1570 = vsub.f32 %v76, %v1569
    %v1571 = vand.u32 %v1570, 4294901760
    %1572 = vmatpush1.msra.mxu0 %v1571
    %1573 = vmatprep.subr.mxu0 0.0
    %v1574 = vand.u32 %v77, 4294901760
    %v1575 = vsub.f32 %v77, %v1574
    %v1576 = vand.u32 %v1575, 4294901760
    %1577 = vmatpush1.msra.mxu0 %v1576
    %1578 = vmatprep.subr.mxu0 0.0
    %v1579 = vand.u32 %v78, 4294901760
    %v1580 = vsub.f32 %v78, %v1579
    %v1581 = vand.u32 %v1580, 4294901760
    %1582 = vmatpush1.msra.mxu0 %v1581
    %1583 = vmatprep.subr.mxu0 0.0
    %v1584 = vand.u32 %v79, 4294901760
    %v1585 = vsub.f32 %v79, %v1584
    %v1586 = vand.u32 %v1585, 4294901760
    %1587 = vmatpush1.msra.mxu0 %v1586
    %1588 = vmatprep.subr.mxu0 0.0
    %v1589 = vand.u32 %v80, 4294901760
    %v1590 = vsub.f32 %v80, %v1589
    %v1591 = vand.u32 %v1590, 4294901760
    %1592 = vmatpush1.msra.mxu0 %v1591
    %1593 = vmatprep.subr.mxu0 0.0
    %v1594 = vand.u32 %v81, 4294901760
    %v1595 = vsub.f32 %v81, %v1594
    %v1596 = vand.u32 %v1595, 4294901760
    %1597 = vmatpush1.msra.mxu0 %v1596
    %1598 = vmatprep.subr.mxu0 0.0
    %v1599 = vand.u32 %v82, 4294901760
    %v1600 = vsub.f32 %v82, %v1599
    %v1601 = vand.u32 %v1600, 4294901760
    %1602 = vmatpush1.msra.mxu0 %v1601
    %1603 = vmatprep.subr.mxu0 0.0
    %v1604 = vand.u32 %v83, 4294901760
    %v1605 = vsub.f32 %v83, %v1604
    %v1606 = vand.u32 %v1605, 4294901760
    %1607 = vmatpush1.msra.mxu0 %v1606
    %1608 = vmatprep.subr.mxu0 0.0
    %v1609 = vand.u32 %v84, 4294901760
    %v1610 = vsub.f32 %v84, %v1609
    %v1611 = vand.u32 %v1610, 4294901760
    %1612 = vmatpush1.msra.mxu0 %v1611
    %1613 = vmatprep.subr.mxu0 0.0
    %v1614 = vand.u32 %v85, 4294901760
    %v1615 = vsub.f32 %v85, %v1614
    %v1616 = vand.u32 %v1615, 4294901760
    %1617 = vmatpush1.msra.mxu0 %v1616
    %1618 = vmatprep.subr.mxu0 0.0
    %v1619 = vand.u32 %v86, 4294901760
    %v1620 = vsub.f32 %v86, %v1619
    %v1621 = vand.u32 %v1620, 4294901760
    %1622 = vmatpush1.msra.mxu0 %v1621
    %1623 = vmatprep.subr.mxu0 0.0
    %v1624 = vand.u32 %v87, 4294901760
    %v1625 = vsub.f32 %v87, %v1624
    %v1626 = vand.u32 %v1625, 4294901760
    %1627 = vmatpush1.msra.mxu0 %v1626
    %1628 = vmatprep.subr.mxu0 0.0
    %v1629 = vand.u32 %v88, 4294901760
    %v1630 = vsub.f32 %v88, %v1629
    %v1631 = vand.u32 %v1630, 4294901760
    %1632 = vmatpush1.msra.mxu0 %v1631
    %1633 = vmatprep.subr.mxu0 0.0
    %v1634 = vand.u32 %v89, 4294901760
    %v1635 = vsub.f32 %v89, %v1634
    %v1636 = vand.u32 %v1635, 4294901760
    %1637 = vmatpush1.msra.mxu0 %v1636
    %1638 = vmatprep.subr.mxu0 0.0
    %v1639 = vand.u32 %v90, 4294901760
    %v1640 = vsub.f32 %v90, %v1639
    %v1641 = vand.u32 %v1640, 4294901760
    %1642 = vmatpush1.msra.mxu0 %v1641
    %1643 = vmatprep.subr.mxu0 0.0
    %v1644 = vand.u32 %v91, 4294901760
    %v1645 = vsub.f32 %v91, %v1644
    %v1646 = vand.u32 %v1645, 4294901760
    %1647 = vmatpush1.msra.mxu0 %v1646
    %1648 = vmatprep.subr.mxu0 0.0
    %v1649 = vand.u32 %v92, 4294901760
    %v1650 = vsub.f32 %v92, %v1649
    %v1651 = vand.u32 %v1650, 4294901760
    %1652 = vmatpush1.msra.mxu0 %v1651
    %1653 = vmatprep.subr.mxu0 0.0
    %v1654 = vand.u32 %v93, 4294901760
    %v1655 = vsub.f32 %v93, %v1654
    %v1656 = vand.u32 %v1655, 4294901760
    %1657 = vmatpush1.msra.mxu0 %v1656
    %1658 = vmatprep.subr.mxu0 0.0
    %v1659 = vand.u32 %v94, 4294901760
    %v1660 = vsub.f32 %v94, %v1659
    %v1661 = vand.u32 %v1660, 4294901760
    %1662 = vmatpush1.msra.mxu0 %v1661
    %1663 = vmatprep.subr.mxu0 0.0
    %v1664 = vand.u32 %v95, 4294901760
    %v1665 = vsub.f32 %v95, %v1664
    %v1666 = vand.u32 %v1665, 4294901760
    %1667 = vmatpush1.msra.mxu0 %v1666
    %1668 = vmatprep.subr.mxu0 0.0
    %v1669 = vand.u32 %v96, 4294901760
    %v1670 = vsub.f32 %v96, %v1669
    %v1671 = vand.u32 %v1670, 4294901760
    %1672 = vmatpush1.msra.mxu0 %v1671
    %1673 = vmatprep.subr.mxu0 0.0
    %v1674 = vand.u32 %v97, 4294901760
    %v1675 = vsub.f32 %v97, %v1674
    %v1676 = vand.u32 %v1675, 4294901760
    %1677 = vmatpush1.msra.mxu0 %v1676
    %1678 = vmatprep.subr.mxu0 0.0
    %v1679 = vand.u32 %v98, 4294901760
    %v1680 = vsub.f32 %v98, %v1679
    %v1681 = vand.u32 %v1680, 4294901760
    %1682 = vmatpush1.msra.mxu0 %v1681
    %1683 = vmatprep.subr.mxu0 0.0
    %v1684 = vand.u32 %v99, 4294901760
    %v1685 = vsub.f32 %v99, %v1684
    %v1686 = vand.u32 %v1685, 4294901760
    %1687 = vmatpush1.msra.mxu0 %v1686
    %1688 = vmatprep.subr.mxu0 0.0
    %v1689 = vand.u32 %v100, 4294901760
    %v1690 = vsub.f32 %v100, %v1689
    %v1691 = vand.u32 %v1690, 4294901760
    %1692 = vmatpush1.msra.mxu0 %v1691
    %1693 = vmatprep.subr.mxu0 0.0
    %v1694 = vand.u32 %v101, 4294901760
    %v1695 = vsub.f32 %v101, %v1694
    %v1696 = vand.u32 %v1695, 4294901760
    %1697 = vmatpush1.msra.mxu0 %v1696
    %1698 = vmatprep.subr.mxu0 0.0
    %v1699 = vand.u32 %v102, 4294901760
    %v1700 = vsub.f32 %v102, %v1699
    %v1701 = vand.u32 %v1700, 4294901760
    %1702 = vmatpush1.msra.mxu0 %v1701
    %1703 = vmatprep.subr.mxu0 0.0
    %v1704 = vand.u32 %v103, 4294901760
    %v1705 = vsub.f32 %v103, %v1704
    %v1706 = vand.u32 %v1705, 4294901760
    %1707 = vmatpush1.msra.mxu0 %v1706
    %1708 = vmatprep.subr.mxu0 0.0
    %v1709 = vand.u32 %v104, 4294901760
    %v1710 = vsub.f32 %v104, %v1709
    %v1711 = vand.u32 %v1710, 4294901760
    %1712 = vmatpush1.msra.mxu0 %v1711
    %1713 = vmatprep.subr.mxu0 0.0
    %v1714 = vand.u32 %v105, 4294901760
    %v1715 = vsub.f32 %v105, %v1714
    %v1716 = vand.u32 %v1715, 4294901760
    %1717 = vmatpush1.msra.mxu0 %v1716
    %v1718 = vand.u32 %v41, 4294901760
    %1719 = vmatprep.mubr.f32.mxu0 %v1718
    %v1720 = vand.u32 %v40, 4294901760
    %1721 = vmatmul.mubr.f32.gmra.mrb[0].mxu0 %v1720
    %v1722 = vpop.f32.mrb[0].mxu0
    %v1723 = vadd.f32 %v1555, %v1722
    %v1724 = vpop.f32.mrb[0].mxu0
    %1725 = vdwg.mxu0
    %1726 = vmatprep.subr.mxu0 0.0
    %v1727 = vand.u32 %v74, 4294901760
    %1728 = vmatpush1.msra.mxu0 %v1727
    %1729 = vmatprep.subr.mxu0 0.0
    %v1730 = vand.u32 %v75, 4294901760
    %1731 = vmatpush1.msra.mxu0 %v1730
    %1732 = vmatprep.subr.mxu0 0.0
    %v1733 = vand.u32 %v76, 4294901760
    %1734 = vmatpush1.msra.mxu0 %v1733
    %1735 = vmatprep.subr.mxu0 0.0
    %v1736 = vand.u32 %v77, 4294901760
    %1737 = vmatpush1.msra.mxu0 %v1736
    %1738 = vmatprep.subr.mxu0 0.0
    %v1739 = vand.u32 %v78, 4294901760
    %1740 = vmatpush1.msra.mxu0 %v1739
    %1741 = vmatprep.subr.mxu0 0.0
    %v1742 = vand.u32 %v79, 4294901760
    %1743 = vmatpush1.msra.mxu0 %v1742
    %1744 = vmatprep.subr.mxu0 0.0
    %v1745 = vand.u32 %v80, 4294901760
    %1746 = vmatpush1.msra.mxu0 %v1745
    %1747 = vmatprep.subr.mxu0 0.0
    %v1748 = vand.u32 %v81, 4294901760
    %1749 = vmatpush1.msra.mxu0 %v1748
    %1750 = vmatprep.subr.mxu0 0.0
    %v1751 = vand.u32 %v82, 4294901760
    %1752 = vmatpush1.msra.mxu0 %v1751
    %1753 = vmatprep.subr.mxu0 0.0
    %v1754 = vand.u32 %v83, 4294901760
    %1755 = vmatpush1.msra.mxu0 %v1754
    %1756 = vmatprep.subr.mxu0 0.0
    %v1757 = vand.u32 %v84, 4294901760
    %1758 = vmatpush1.msra.mxu0 %v1757
    %1759 = vmatprep.subr.mxu0 0.0
    %v1760 = vand.u32 %v85, 4294901760
    %1761 = vmatpush1.msra.mxu0 %v1760
    %1762 = vmatprep.subr.mxu0 0.0
    %v1763 = vand.u32 %v86, 4294901760
    %1764 = vmatpush1.msra.mxu0 %v1763
    %1765 = vmatprep.subr.mxu0 0.0
    %v1766 = vand.u32 %v87, 4294901760
    %1767 = vmatpush1.msra.mxu0 %v1766
    %1768 = vmatprep.subr.mxu0 0.0
    %v1769 = vand.u32 %v88, 4294901760
    %1770 = vmatpush1.msra.mxu0 %v1769
    %1771 = vmatprep.subr.mxu0 0.0
    %v1772 = vand.u32 %v89, 4294901760
    %1773 = vmatpush1.msra.mxu0 %v1772
    %1774 = vmatprep.subr.mxu0 0.0
    %v1775 = vand.u32 %v90, 4294901760
    %1776 = vmatpush1.msra.mxu0 %v1775
    %1777 = vmatprep.subr.mxu0 0.0
    %v1778 = vand.u32 %v91, 4294901760
    %1779 = vmatpush1.msra.mxu0 %v1778
    %1780 = vmatprep.subr.mxu0 0.0
    %v1781 = vand.u32 %v92, 4294901760
    %1782 = vmatpush1.msra.mxu0 %v1781
    %1783 = vmatprep.subr.mxu0 0.0
    %v1784 = vand.u32 %v93, 4294901760
    %1785 = vmatpush1.msra.mxu0 %v1784
    %1786 = vmatprep.subr.mxu0 0.0
    %v1787 = vand.u32 %v94, 4294901760
    %1788 = vmatpush1.msra.mxu0 %v1787
    %1789 = vmatprep.subr.mxu0 0.0
    %v1790 = vand.u32 %v95, 4294901760
    %1791 = vmatpush1.msra.mxu0 %v1790
    %1792 = vmatprep.subr.mxu0 0.0
    %v1793 = vand.u32 %v96, 4294901760
    %1794 = vmatpush1.msra.mxu0 %v1793
    %1795 = vmatprep.subr.mxu0 0.0
    %v1796 = vand.u32 %v97, 4294901760
    %1797 = vmatpush1.msra.mxu0 %v1796
    %1798 = vmatprep.subr.mxu0 0.0
    %v1799 = vand.u32 %v98, 4294901760
    %1800 = vmatpush1.msra.mxu0 %v1799
    %1801 = vmatprep.subr.mxu0 0.0
    %v1802 = vand.u32 %v99, 4294901760
    %1803 = vmatpush1.msra.mxu0 %v1802
    %1804 = vmatprep.subr.mxu0 0.0
    %v1805 = vand.u32 %v100, 4294901760
    %1806 = vmatpush1.msra.mxu0 %v1805
    %1807 = vmatprep.subr.mxu0 0.0
    %v1808 = vand.u32 %v101, 4294901760
    %1809 = vmatpush1.msra.mxu0 %v1808
    %1810 = vmatprep.subr.mxu0 0.0
    %v1811 = vand.u32 %v102, 4294901760
    %1812 = vmatpush1.msra.mxu0 %v1811
    %1813 = vmatprep.subr.mxu0 0.0
    %v1814 = vand.u32 %v103, 4294901760
    %1815 = vmatpush1.msra.mxu0 %v1814
    %1816 = vmatprep.subr.mxu0 0.0
    %v1817 = vand.u32 %v104, 4294901760
    %1818 = vmatpush1.msra.mxu0 %v1817
    %1819 = vmatprep.subr.mxu0 0.0
    %v1820 = vand.u32 %v105, 4294901760
    %1821 = vmatpush1.msra.mxu0 %v1820
    %v1822 = vand.u32 %v41, 4294901760
    %1823 = vmatprep.mubr.f32.mxu0 %v1822
    %v1824 = vand.u32 %v40, 4294901760
    %1825 = vmatmul.mubr.f32.gmra.mrb[0].mxu0 %v1824
    %v1826 = vpop.f32.mrb[0].mxu0
    %v1827 = vadd.f32 %v1723, %v1826
    %v1828 = vpop.f32.mrb[0].mxu0
    %1829 = vdwg.mxu0
    %1830 = vst [vmem:[#allocation7] sm:$0xff] %v1827
    // Predicated region
    $region18: #{tpu_custom_call.1} parent=1 // pred_check
      _
    $region19: #{tpu_custom_call.1} parent=1 // pred_check_branch
      %1832 = sbr.rel (0) target = $region21
    $region20: #{tpu_custom_call.1} parent=1 // pred_region
      %s1834 = ssub.s32 128, 128
      %1835 = vsyncadd [#allocation4], %s1834
      %s1837 = sshll.u32 [#allocation7], 4
      %s1838 = int_to_ptr.vmem [resolvable:$true] %s1837
      %1840 = dma.vmem_to_hbm [thread:$0]  %s1838, 128, %s2, [#allocation4]
    $region21: #{tpu_custom_call.1} parent=1 // pred_fallthru
      _
    // Predicated region
    $region22: #{tpu_custom_call.1} parent=1 // pred_check
      _
    $region23: #{tpu_custom_call.1} parent=1 // pred_check_branch
      %1842 = sbr.rel (0) target = $region25
    $region24: #{tpu_custom_call.1} parent=1 // pred_region
      %1843 = dma.done [#allocation4], 128
    $region25: #{tpu_custom_call.1} parent=1 // pred_fallthru
      _
    %1844 = vsyncpa [#allocation3], 1
    %1845 = vsyncpa [#allocation6], 1
    %1846 = vsyncpa [#allocation4], 1

</llo_original>
